<compile_context>
chip_gen: v7x
topology: tpu7x:2x2x1
jax: 0.10.0
libtpu: 0.0.40
codegen_flags: <defaults>
</compile_context>

<pallas_src>
import functools

import jax
import jax.numpy as jnp
from jax.experimental import pallas as pl
from jax.experimental.pallas import tpu as pltpu


_LANES = 128


def _round_up(x, m):
    return ((x + m - 1) // m) * m


def _cdiv(a, b):
    return (a + b - 1) // b


def _vmem_limit_bytes():
    """Scoped-VMEM limit: ~75% of physical VMEM, with a safe fallback."""
    try:
        cap = int(pltpu.get_tpu_info().vmem_capacity_bytes)
    except Exception:
        cap = 64 * 1024 * 1024
    return max(32 * 1024 * 1024, min(cap * 3 // 4, 112 * 1024 * 1024))


def _pick_rows_per_tile(n_rows, bytes_per_row, vmem_limit, tm_max=8192):
    """Rows per grid step: as large as the VMEM budget allows, but keep at
    least ~8 tiles (for multi-TensorCore chips) when the data is big enough."""
    cap = int(vmem_limit * 0.6) // max(bytes_per_row, 1)
    tm = min(tm_max, max(16, cap))                              # budget always wins
    tm = min(tm, max(1024, _round_up(_cdiv(n_rows, 8), 16)))    # feed both v7x TCs
    tm = min(tm, _round_up(n_rows, 16))                         # don't exceed data
    return max(16, (tm // 16) * 16)


def _focal_weight_times_log(prob, gamma):
    """(1 - p)^gamma * log(p); integer gamma uses repeated multiplies."""
    one_minus = 1.0 - prob
    g = float(gamma)
    if g == int(g) and 0 <= int(g) <= 8:
        gi = int(g)
        if gi == 0:
            w = jnp.ones_like(one_minus)
        else:
            w = one_minus
            for _ in range(gi - 1):
                w = w * one_minus
    else:
        # clamp guards pow(negative, fractional) from ~1-ulp rounding of prob
        w = jnp.maximum(one_minus, 0.0) ** g
    return w * jnp.log(prob)


def _focal_kernel_packed(nvalid_ref, pred_ref, lab_ref, out_ref, *,
                         gamma, eps, num_classes, tm, logits):
    """Packed layout: each VMEM row holds R = 128/C examples x C classes."""
    C = num_classes
    R = _LANES // C
    log2_c = C.bit_length() - 1

    p = pred_ref[...].astype(jnp.float32)                        # (TM, 128)
    labels = lab_ref[...]                                        # (TM, R) i32

    lane = jax.lax.broadcasted_iota(jnp.int32, (tm, _LANES), 1)
    cls = jnp.bitwise_and(lane, C - 1)                           # class of lane
    slot = jnp.right_shift(lane, log2_c)                         # example slot

    # 0/1 helper matrices for segmented sums / broadcasts on the idle MXU.
    compact = (jnp.right_shift(
        jax.lax.broadcasted_iota(jnp.int32, (_LANES, R), 0), log2_c)
        == jax.lax.broadcasted_iota(jnp.int32, (_LANES, R), 1)
    ).astype(jnp.float32)                                        # (128, R)
    expand = (jax.lax.broadcasted_iota(jnp.int32, (R, _LANES), 0)
              == jnp.right_shift(
                  jax.lax.broadcasted_iota(jnp.int32, (R, _LANES), 1), log2_c)
              ).astype(jnp.float32)                              # (R, 128)

    if logits:
        # Row-global max shift (see numerics note at top of file).
        m = jnp.max(p, axis=-1, keepdims=True)                   # (TM, 1)
        e = jnp.exp(p - m)                                       # (TM, 128)
        # Per-example sums, compacted then broadcast back within each C-lane
        # group; HIGHEST precision keeps the f32 accuracy of the reference.
        sum_c = jnp.dot(e, compact, preferred_element_type=jnp.float32,
                        precision=jax.lax.Precision.HIGHEST)     # (TM, R)
        seg_sum = jnp.dot(sum_c, expand, preferred_element_type=jnp.float32,
                          precision=jax.lax.Precision.HIGHEST)   # (TM, 128)
        prob = e / seg_sum                                       # lane softmax
    else:
        prob = p

    # Broadcast each example's label to its C lanes with a tiny 0/1 matmul
    # (exact even at default MXU precision: small ints, single-term sums).
    lab_b = jnp.dot(labels.astype(jnp.float32), expand,
                    preferred_element_type=jnp.float32)          # (TM, 128)
    onehot = jnp.abs(lab_b - cls.astype(jnp.float32)) < 0.5

    # eps adjustment exactly as in the PyTorch module.
    prob = jnp.where(prob > 0.5, prob - eps, prob + eps)

    # Non-true-class lanes and padding examples get prob -> 1.0 so they
    # contribute exactly (1-1)^gamma * log(1) = 0 to the tile sum.
    row = jax.lax.broadcasted_iota(jnp.int32, (tm, _LANES), 0)
    ex_idx = (pl.program_id(0) * tm + row) * R + slot
    keep = jnp.logical_and(onehot, ex_idx < nvalid_ref[0])
    prob = jnp.where(keep, prob, 1.0)

    loss = _focal_weight_times_log(prob, gamma)                  # (TM, 128)
    out_ref[...] = jnp.full(out_ref.shape, jnp.sum(loss), dtype=jnp.float32)


def _focal_kernel_rows(nvalid_ref, pred_ref, lab_ref, out_ref, *,
                       gamma, eps, tm, logits):
    """General layout: one example per row, class dim on the lanes."""
    p = pred_ref[...].astype(jnp.float32)                        # (TM, C)
    labels = lab_ref[...]                                        # (TM, 1) i32

    cls = jax.lax.broadcasted_iota(jnp.int32, p.shape, 1)
    onehot = cls == labels

    if logits:
        m = jnp.max(p, axis=-1, keepdims=True)
        e = jnp.exp(p - m)
        sum_e = jnp.sum(e, axis=-1, keepdims=True)
        e_true = jnp.sum(jnp.where(onehot, e, 0.0), axis=-1, keepdims=True)
        prob = e_true / sum_e                                    # (TM, 1)
    else:
        prob = jnp.sum(jnp.where(onehot, p, 0.0), axis=-1, keepdims=True)

    prob = jnp.where(prob > 0.5, prob - eps, prob + eps)

    row = pl.program_id(0) * tm + jax.lax.broadcasted_iota(jnp.int32, (tm, 1), 0)
    prob = jnp.where(row < nvalid_ref[0], prob, 1.0)

    loss = _focal_weight_times_log(prob, gamma)                  # (TM, 1)
    out_ref[...] = jnp.full(out_ref.shape, jnp.sum(loss), dtype=jnp.float32)


def categorical_focal_loss(predictions, groundtruths, *, gamma=2.0, eps=1e-7,
                           logits=True, dim=-1):
    """Mean categorical focal loss (matches the PyTorch module's forward).

    predictions: (..., C) float (native dtype, streamed without upcast);
    groundtruths: (...,) integer class ids.  Returns a scalar float32.
    """
    if dim not in (-1, predictions.ndim - 1):
        predictions = jnp.moveaxis(predictions, dim, -1)

    c = int(predictions.shape[-1])
    pred2d = predictions.reshape(-1, c)                          # native dtype
    lab1d = groundtruths.reshape(-1).astype(jnp.int32)
    n = pred2d.shape[0]
    itemsize = pred2d.dtype.itemsize
    vmem_limit = _vmem_limit_bytes()

    use_packed = (c < _LANES) and (_LANES % c == 0)

    if use_packed:
        r = _LANES // c                                          # examples / row
        rows = _cdiv(n, r)
        bytes_per_row = (2 * _LANES * itemsize                   # preds, 2-buffered
                         + 2 * _LANES * 4                        # labels (lane pad)
                         + 10 * _LANES * 4)                      # f32 temporaries
        tm = _pick_rows_per_tile(rows, bytes_per_row, vmem_limit)
        n_tiles = _cdiv(rows, tm)
        n_pad = n_tiles * tm * r
        if n_pad != n:
            pred2d = jnp.pad(pred2d, ((0, n_pad - n), (0, 0)))
            lab1d = jnp.pad(lab1d, (0, n_pad - n))
        pred_in = pred2d.reshape(n_tiles * tm, _LANES)           # free reshape
        lab_in = lab1d.reshape(n_tiles * tm, r)
        kernel = functools.partial(_focal_kernel_packed, gamma=float(gamma),
                                   eps=float(eps), num_classes=c, tm=tm,
                                   logits=logits)
        in_specs = [pl.BlockSpec((tm, _LANES), lambda i, nv: (i, 0)),
                    pl.BlockSpec((tm, r), lambda i, nv: (i, 0))]
        flops = 20 * n_pad * c + 4 * (n_tiles * tm) * _LANES * r
        transcendentals = 3 * n_pad * c
    else:
        # General path; class dim stays on the lanes.
        # TODO(synk): online-softmax chunking over C for vocab-scale classes.
        c_pad = _round_up(c, _LANES)
        bytes_per_row = 2 * c_pad * itemsize + 2 * _LANES * 4 + 8 * c_pad * 4
        tm = _pick_rows_per_tile(n, bytes_per_row, vmem_limit)
        n_tiles = _cdiv(n, tm)
        n_pad = n_tiles * tm
        if n_pad != n:
            pred2d = jnp.pad(pred2d, ((0, n_pad - n), (0, 0)))
            lab1d = jnp.pad(lab1d, (0, n_pad - n))
        pred_in = pred2d
        lab_in = lab1d.reshape(n_pad, 1)
        kernel = functools.partial(_focal_kernel_rows, gamma=float(gamma),
                                   eps=float(eps), tm=tm, logits=logits)
        in_specs = [pl.BlockSpec((tm, c), lambda i, nv: (i, 0)),
                    pl.BlockSpec((tm, 1), lambda i, nv: (i, 0))]
        flops = 12 * n_pad * c
        transcendentals = 2 * n_pad * c

    cost = pl.CostEstimate(
        flops=int(flops),
        transcendentals=int(transcendentals),
        bytes_accessed=int(n_pad * c * itemsize + n_pad * 4
                           + n_tiles * _LANES * 4),
    )

    n_valid = jnp.array([n], dtype=jnp.int32)

    partials = pl.pallas_call(
        kernel,
        out_shape=jax.ShapeDtypeStruct((n_tiles, _LANES), jnp.float32),
        grid_spec=pltpu.PrefetchScalarGridSpec(
            num_scalar_prefetch=1,
            grid=(n_tiles,),
            in_specs=in_specs,
            out_specs=pl.BlockSpec((1, _LANES), lambda i, nv: (i, 0)),
        ),
        compiler_params=pltpu.CompilerParams(
            dimension_semantics=("parallel",),
            vmem_limit_bytes=vmem_limit,
        ),
        cost_estimate=cost,
    )(n_valid, pred_in, lab_in)

    # Tiny final reduction over n_tiles scalars; divide by the TRUE count.
    return jnp.sum(partials[:, 0]) / jnp.float32(n)


def _reference(predictions, groundtruths, gamma=2.0, eps=1e-7):
    c = predictions.shape[-1]
    onehots = jax.nn.one_hot(groundtruths, c, dtype=jnp.float32)
    sm = jax.nn.softmax(predictions.astype(jnp.float32), axis=-1)
    probs = jnp.sum(onehots * sm, axis=-1)
    probs = jnp.where(probs > 0.5, probs - eps, probs + eps)
    loss = (1.0 - probs) ** gamma * jnp.log(probs)
    return jnp.mean(loss)


if __name__ == "__main__":
    key = jax.random.PRNGKey(0)
    kp, kl = jax.random.split(key)

    B, H, W, C = 2, 16, 16, 4
    predictions = jax.random.normal(kp, (B, H, W, C), dtype=jnp.float32)
    groundtruths = jax.random.randint(kl, (B, H, W), 0, C, dtype=jnp.int32)

    loss = categorical_focal_loss(predictions, groundtruths, gamma=2.0,
                                  eps=1e-7)
    loss = jax.block_until_ready(loss)

    ref = _reference(predictions, groundtruths, gamma=2.0, eps=1e-7)
    assert jnp.allclose(loss, ref, atol=1e-5, rtol=1e-5), (loss, ref)

    print("KERNEL_OK")
</pallas_src>

<mosaic_0001>
module attributes {stable_mosaic.version = 11 : i64} {
  func.func @_focal_kernel_packed(%arg0: i32, %arg1: memref<1xi32, #tpu.memory_space<smem>>, %arg2: memref<16x128xf32, #tpu.memory_space<vmem>>, %arg3: memref<16x32xi32, #tpu.memory_space<vmem>>, %arg4: memref<1x128xf32, #tpu.memory_space<vmem>>) attributes {dimension_semantics = [#tpu.dimension_semantics<parallel>], iteration_bounds = array<i64: 1>, scalar_prefetch = 1 : i64, scratch_operands = 0 : i64, tpu.core_type = #tpu.core_type<tc>, window_params = [{transform_indices = @transform_0, window_bounds = array<i64: 16, 128>}, {transform_indices = @transform_1, window_bounds = array<i64: 16, 32>}, {transform_indices = @transform_2, window_bounds = array<i64: 1, 128>}]} {
    %c0 = arith.constant 0 : index
    %c0_0 = arith.constant 0 : index
    %0 = vector.load %arg2[%c0, %c0_0] : memref<16x128xf32, #tpu.memory_space<vmem>>, vector<16x128xf32>
    %c0_1 = arith.constant 0 : index
    %c0_2 = arith.constant 0 : index
    %1 = vector.load %arg3[%c0_1, %c0_2] : memref<16x32xi32, #tpu.memory_space<vmem>>, vector<16x32xi32>
    %2 = tpu.iota {dimensions = array<i32: 1>} : vector<16x128xi32>
    %c3_i32 = arith.constant 3 : i32
    %3 = vector.broadcast %c3_i32 : i32 to vector<16x128xi32>
    %4 = arith.andi %2, %3 : vector<16x128xi32>
    %c2_i32 = arith.constant 2 : i32
    %5 = vector.broadcast %c2_i32 : i32 to vector<16x128xi32>
    %6 = arith.shrsi %2, %5 : vector<16x128xi32>
    %7 = tpu.iota {dimensions = array<i32: 0>} : vector<128x32xi32>
    %c2_i32_3 = arith.constant 2 : i32
    %8 = vector.broadcast %c2_i32_3 : i32 to vector<128x32xi32>
    %9 = arith.shrsi %7, %8 : vector<128x32xi32>
    %10 = tpu.iota {dimensions = array<i32: 1>} : vector<128x32xi32>
    %11 = arith.cmpi eq, %9, %10 : vector<128x32xi32>
    %12 = arith.extui %11 : vector<128x32xi1> to vector<128x32xi32>
    %13 = arith.sitofp %12 : vector<128x32xi32> to vector<128x32xf32>
    %14 = tpu.iota {dimensions = array<i32: 0>} : vector<32x128xi32>
    %15 = tpu.iota {dimensions = array<i32: 1>} : vector<32x128xi32>
    %c2_i32_4 = arith.constant 2 : i32
    %16 = vector.broadcast %c2_i32_4 : i32 to vector<32x128xi32>
    %17 = arith.shrsi %15, %16 : vector<32x128xi32>
    %18 = arith.cmpi eq, %14, %17 : vector<32x128xi32>
    %19 = arith.extui %18 : vector<32x128xi1> to vector<32x128xi32>
    %20 = arith.sitofp %19 : vector<32x128xi32> to vector<32x128xf32>
    %cst = arith.constant dense<0xFF800000> : vector<16xf32>
    %21 = vector.multi_reduction <maximumf>, %0, %cst [1] : vector<16x128xf32> to vector<16xf32>
    %22 = vector.shape_cast %21 : vector<16xf32> to vector<16x1xf32>
    %23 = vector.broadcast %22 : vector<16x1xf32> to vector<16x128xf32>
    %24 = arith.subf %0, %23 : vector<16x128xf32>
    %25 = math.exp %24 : vector<16x128xf32>
    %cst_5 = arith.constant dense<0.000000e+00> : vector<16x32xf32>
    %26 = tpu.matmul %25, %13, %cst_5 {dimension_numbers = #tpu.dot_dimension_numbers<[1], [0], [0], [1], [0, 0, 1, 1], [], []>, precision = #tpu.contract_precision<fp32>} : vector<16x128xf32>, vector<128x32xf32>, vector<16x32xf32> -> vector<16x32xf32>
    %cst_6 = arith.constant dense<0.000000e+00> : vector<16x128xf32>
    %27 = tpu.matmul %26, %20, %cst_6 {dimension_numbers = #tpu.dot_dimension_numbers<[1], [0], [0], [1], [0, 0, 1, 1], [], []>, precision = #tpu.contract_precision<fp32>} : vector<16x32xf32>, vector<32x128xf32>, vector<16x128xf32> -> vector<16x128xf32>
    %28 = arith.divf %25, %27 : vector<16x128xf32>
    %29 = arith.sitofp %1 : vector<16x32xi32> to vector<16x32xf32>
    %cst_7 = arith.constant dense<0.000000e+00> : vector<16x128xf32>
    %30 = tpu.matmul %29, %20, %cst_7 {dimension_numbers = #tpu.dot_dimension_numbers<[1], [0], [0], [1], [0, 0, 1, 1], [], []>} : vector<16x32xf32>, vector<32x128xf32>, vector<16x128xf32> -> vector<16x128xf32>
    %31 = arith.sitofp %4 : vector<16x128xi32> to vector<16x128xf32>
    %32 = arith.subf %30, %31 : vector<16x128xf32>
    %33 = math.absf %32 : vector<16x128xf32>
    %cst_8 = arith.constant 5.000000e-01 : f32
    %34 = vector.broadcast %cst_8 : f32 to vector<16x128xf32>
    %35 = arith.cmpf olt, %33, %34 : vector<16x128xf32>
    %cst_9 = arith.constant 5.000000e-01 : f32
    %36 = vector.broadcast %cst_9 : f32 to vector<16x128xf32>
    %37 = arith.cmpf ogt, %28, %36 : vector<16x128xf32>
    %cst_10 = arith.constant 1.000000e-07 : f32
    %38 = vector.broadcast %cst_10 : f32 to vector<16x128xf32>
    %39 = arith.subf %28, %38 : vector<16x128xf32>
    %cst_11 = arith.constant 1.000000e-07 : f32
    %40 = vector.broadcast %cst_11 : f32 to vector<16x128xf32>
    %41 = arith.addf %28, %40 : vector<16x128xf32>
    %42 = arith.select %37, %39, %41 : vector<16x128xi1>, vector<16x128xf32>
    %43 = tpu.iota {dimensions = array<i32: 0>} : vector<16x128xi32>
    %c16_i32 = arith.constant 16 : i32
    %44 = arith.muli %arg0, %c16_i32 : i32
    %45 = vector.broadcast %44 : i32 to vector<16x128xi32>
    %46 = arith.addi %45, %43 : vector<16x128xi32>
    %c32_i32 = arith.constant 32 : i32
    %47 = vector.broadcast %c32_i32 : i32 to vector<16x128xi32>
    %48 = arith.muli %46, %47 : vector<16x128xi32>
    %49 = arith.addi %48, %6 : vector<16x128xi32>
    %c0_12 = arith.constant 0 : index
    %50 = memref.load %arg1[%c0_12] : memref<1xi32, #tpu.memory_space<smem>>
    %51 = vector.broadcast %50 : i32 to vector<16x128xi32>
    %52 = arith.cmpi slt, %49, %51 : vector<16x128xi32>
    %53 = arith.andi %35, %52 : vector<16x128xi1>
    %cst_13 = arith.constant 1.000000e+00 : f32
    %54 = vector.broadcast %cst_13 : f32 to vector<16x128xf32>
    %55 = arith.select %53, %42, %54 : vector<16x128xi1>, vector<16x128xf32>
    %cst_14 = arith.constant 1.000000e+00 : f32
    %56 = vector.broadcast %cst_14 : f32 to vector<16x128xf32>
    %57 = arith.subf %56, %55 : vector<16x128xf32>
    %58 = arith.mulf %57, %57 : vector<16x128xf32>
    %59 = math.log %55 : vector<16x128xf32>
    %60 = arith.mulf %58, %59 : vector<16x128xf32>
    %61 = vector.shape_cast %60 : vector<16x128xf32> to vector<1x16x128xf32>
    %cst_15 = arith.constant dense<0.000000e+00> : vector<1xf32>
    %62 = vector.multi_reduction <add>, %61, %cst_15 [1, 2] : vector<1x16x128xf32> to vector<1xf32>
    %63 = vector.shape_cast %62 : vector<1xf32> to vector<1x1x1xf32>
    %64 = vector.extract %63[0, 0, 0] : f32 from vector<1x1x1xf32>
    %65 = vector.broadcast %64 : f32 to vector<1x128xf32>
    %c0_16 = arith.constant 0 : index
    %c0_17 = arith.constant 0 : index
    %66 = vector.load %arg4[%c0_16, %c0_17] : memref<1x128xf32, #tpu.memory_space<vmem>>, vector<1x128xf32>
    tpu.vector_store %arg4[%c0_16, %c0_17], %65 {strides = array<i32>} : memref<1x128xf32, #tpu.memory_space<vmem>>, vector<1x128xf32>,
    return
  }
  func.func @transform_0(%arg0: i32, %arg1: memref<1xi32, #tpu.memory_space<smem>>) -> (i32, i32) {
    %c0_i32 = arith.constant 0 : i32
    %c0_i32_0 = arith.constant 0 : i32
    return %arg0, %c0_i32 : i32, i32
  }
  func.func @transform_1(%arg0: i32, %arg1: memref<1xi32, #tpu.memory_space<smem>>) -> (i32, i32) {
    %c0_i32 = arith.constant 0 : i32
    %c0_i32_0 = arith.constant 0 : i32
    return %arg0, %c0_i32 : i32, i32
  }
  func.func @transform_2(%arg0: i32, %arg1: memref<1xi32, #tpu.memory_space<smem>>) -> (i32, i32) {
    %c0_i32 = arith.constant 0 : i32
    %c0_i32_0 = arith.constant 0 : i32
    return %arg0, %c0_i32 : i32, i32
  }
}

</mosaic_0001>

<llo_original>
// kernel: tpu_custom_call.1
$region0: #{tpu_custom_call.1}
  #allocation0 [shape = 'u32[]', space=smem, size = 0x4, offset = 0x4, fixed_abs, tag = 'smem constant byte address 0x4 - core index']
  #allocation1 [shape = 'u32[144,128]{1,0:T(1,128)}', space=vmem, size = 0x12000, scoped, tag = 'internal scratch']
  #allocation2 [shape = 's32[1]{0}', space=sflag, size = 0x4, scoped, tag = 'scoped memory for tpu_custom_call.1']
  #allocation3 [shape = 's32[1]{0:T(128)S(6)}', space=smem, size = 0x200, scoped, tag = 'prefetched SMEM operand 0']
  %s0 = inlined_call_operand.<no memory space> [shape: s32[1], index: 0, kind: input, shape index: {}]
  %s1 = inlined_call_operand.hbm [shape: f32[16,128], index: 1, kind: input, shape index: {}]
  %s2 = inlined_call_operand.hbm [shape: s32[16,32], index: 2, kind: input, shape index: {}]
  %s3 = inlined_call_operand.hbm [shape: f32[1,128], index: 3, kind: output, shape index: {}]
  %s4 = sld [smem:[#allocation0]]
  $region26: #{tpu_custom_call.1} parent=0
    _
  %s6 = ssub.s32 1, %s4
  %s7 = scalar_select 0, %s6, %s4
  %8 = sst [smem:[#allocation3]] %s0
  $region1: #{tpu_custom_call.1} parent=0
    #allocation4 [shape = 'u8[8192]{0}', space=vmem, size = 0x2000, scoped, tag = 'input window, operand 1, single buffered']
    #allocation5 [shape = 's32[1]{0}', space=sflag, size = 0x4, scoped, tag = 'scoped memory for tpu_custom_call.1']
    #allocation6 [shape = 's32[1]{0}', space=sflag, size = 0x4, scoped, tag = 'scoped memory for tpu_custom_call.1']
    #allocation7 [shape = 'u8[8192]{0}', space=vmem, size = 0x2000, scoped, tag = 'input window, operand 2, single buffered']
    #allocation8 [shape = 's32[1]{0}', space=sflag, size = 0x4, scoped, tag = 'scoped memory for tpu_custom_call.1']
    #allocation9 [shape = 'u8[512]{0}', space=vmem, size = 0x400, scoped, tag = 'output window, operand 0, single buffered']
    %9 = vsyncpa [#allocation5], 0
    %10 = vsyncpa [#allocation8], 0
    %11 = vsyncpa [#allocation6], 0
    // Predicated region
    $region2: #{tpu_custom_call.1} parent=1 // pred_check
      _
    $region3: #{tpu_custom_call.1} parent=1 // pred_check_branch
      %13 = sbr.rel (0) target = $region5
    $region4: #{tpu_custom_call.1} parent=1 // pred_region
      %s15 = ssub.s32 256, 256
      %16 = vsyncadd [#allocation5], %s15
      %s17 = sshll.u32 [#allocation4], 4
      %s18 = int_to_ptr.vmem [resolvable:$true] %s17
      %23 = dma.hbm_to_vmem [thread:$0]  %s1, 256, %s18, [#allocation5], 128, 128, 8
    $region5: #{tpu_custom_call.1} parent=1 // pred_fallthru
      _
    // Predicated region
    $region6: #{tpu_custom_call.1} parent=1 // pred_check
      _
    $region7: #{tpu_custom_call.1} parent=1 // pred_check_branch
      %25 = sbr.rel (0) target = $region9
    $region8: #{tpu_custom_call.1} parent=1 // pred_region
      %s27 = ssub.s32 256, 256
      %28 = vsyncadd [#allocation8], %s27
      %s29 = sshll.u32 [#allocation7], 4
      %s30 = int_to_ptr.vmem [resolvable:$true] %s29
      %35 = dma.hbm_to_vmem [thread:$0]  %s2, 256, %s30, [#allocation8], 128, 128, 8
    $region9: #{tpu_custom_call.1} parent=1 // pred_fallthru
      _
    // Predicated region
    $region10: #{tpu_custom_call.1} parent=1 // pred_check
      _
    $region11: #{tpu_custom_call.1} parent=1 // pred_check_branch
      %37 = sbr.rel (0) target = $region13
    $region12: #{tpu_custom_call.1} parent=1 // pred_region
      %38 = dma.done [#allocation5], 256
    $region13: #{tpu_custom_call.1} parent=1 // pred_fallthru
      _
    // Predicated region
    $region14: #{tpu_custom_call.1} parent=1 // pred_check
      _
    $region15: #{tpu_custom_call.1} parent=1 // pred_check_branch
      %40 = sbr.rel (0) target = $region17
    $region16: #{tpu_custom_call.1} parent=1 // pred_region
      %41 = dma.done [#allocation8], 256
    $region17: #{tpu_custom_call.1} parent=1 // pred_fallthru
      _
    %v42 = vld [vmem:[#allocation4] sm:$0xff]
    %v43 = vld [vmem:[#allocation4 + $0x8] sm:$0xff]
    %v44 = vld [vmem:[#allocation7] sm:$0xff]
    %v45 = vld [vmem:[#allocation7 + $0x8] sm:$0xff]
    %v46 = vlaneseq
    %v47 = vand.u32 %v46, 127
    %v48 = vand.u32 %v47, 3
    %v49 = vshra.s32 %v47, 2
    %v50 = vlaneseq
    %v51 = vshrl.u32 %v50, 7
    %v52 = vadd.s32 %v51, 8
    %v53 = vadd.s32 %v51, 16
    %v54 = vadd.s32 %v51, 24
    %v55 = vadd.s32 %v51, 32
    %v56 = vadd.s32 %v51, 40
    %v57 = vadd.s32 %v51, 48
    %v58 = vadd.s32 %v51, 56
    %v59 = vadd.s32 %v51, 64
    %v60 = vadd.s32 %v51, 72
    %v61 = vadd.s32 %v51, 80
    %v62 = vadd.s32 %v51, 88
    %v63 = vadd.s32 %v51, 96
    %v64 = vadd.s32 %v51, 104
    %v65 = vadd.s32 %v51, 112
    %v66 = vadd.s32 %v51, 120
    %v67 = vshra.s32 %v51, 2
    %v68 = vshra.s32 %v52, 2
    %v69 = vshra.s32 %v53, 2
    %v70 = vshra.s32 %v54, 2
    %v71 = vshra.s32 %v55, 2
    %v72 = vshra.s32 %v56, 2
    %v73 = vshra.s32 %v57, 2
    %v74 = vshra.s32 %v58, 2
    %v75 = vshra.s32 %v59, 2
    %v76 = vshra.s32 %v60, 2
    %v77 = vshra.s32 %v61, 2
    %v78 = vshra.s32 %v62, 2
    %v79 = vshra.s32 %v63, 2
    %v80 = vshra.s32 %v64, 2
    %v81 = vshra.s32 %v65, 2
    %v82 = vshra.s32 %v66, 2
    %vm83 = vcmp.eq.s32.totalorder %v67, %v47
    %vm84 = vcmp.eq.s32.totalorder %v68, %v47
    %vm85 = vcmp.eq.s32.totalorder %v69, %v47
    %vm86 = vcmp.eq.s32.totalorder %v70, %v47
    %vm87 = vcmp.eq.s32.totalorder %v71, %v47
    %vm88 = vcmp.eq.s32.totalorder %v72, %v47
    %vm89 = vcmp.eq.s32.totalorder %v73, %v47
    %vm90 = vcmp.eq.s32.totalorder %v74, %v47
    %vm91 = vcmp.eq.s32.totalorder %v75, %v47
    %vm92 = vcmp.eq.s32.totalorder %v76, %v47
    %vm93 = vcmp.eq.s32.totalorder %v77, %v47
    %vm94 = vcmp.eq.s32.totalorder %v78, %v47
    %vm95 = vcmp.eq.s32.totalorder %v79, %v47
    %vm96 = vcmp.eq.s32.totalorder %v80, %v47
    %vm97 = vcmp.eq.s32.totalorder %v81, %v47
    %vm98 = vcmp.eq.s32.totalorder %v82, %v47
    %v99 = vsel %vm83, 1, 0
    %v100 = vsel %vm84, 1, 0
    %v101 = vsel %vm85, 1, 0
    %v102 = vsel %vm86, 1, 0
    %v103 = vsel %vm87, 1, 0
    %v104 = vsel %vm88, 1, 0
    %v105 = vsel %vm89, 1, 0
    %v106 = vsel %vm90, 1, 0
    %v107 = vsel %vm91, 1, 0
    %v108 = vsel %vm92, 1, 0
    %v109 = vsel %vm93, 1, 0
    %v110 = vsel %vm94, 1, 0
    %v111 = vsel %vm95, 1, 0
    %v112 = vsel %vm96, 1, 0
    %v113 = vsel %vm97, 1, 0
    %v114 = vsel %vm98, 1, 0
    %v115 = vcvt.s32.f32 %v99
    %v116 = vcvt.s32.f32 %v100
    %v117 = vcvt.s32.f32 %v101
    %v118 = vcvt.s32.f32 %v102
    %v119 = vcvt.s32.f32 %v103
    %v120 = vcvt.s32.f32 %v104
    %v121 = vcvt.s32.f32 %v105
    %v122 = vcvt.s32.f32 %v106
    %v123 = vcvt.s32.f32 %v107
    %v124 = vcvt.s32.f32 %v108
    %v125 = vcvt.s32.f32 %v109
    %v126 = vcvt.s32.f32 %v110
    %v127 = vcvt.s32.f32 %v111
    %v128 = vcvt.s32.f32 %v112
    %v129 = vcvt.s32.f32 %v113
    %v130 = vcvt.s32.f32 %v114
    %vm131 = vcmp.eq.s32.totalorder %v51, %v49
    %vm132 = vcmp.eq.s32.totalorder %v52, %v49
    %vm133 = vcmp.eq.s32.totalorder %v53, %v49
    %vm134 = vcmp.eq.s32.totalorder %v54, %v49
    %v135 = vsel %vm131, 1, 0
    %v136 = vsel %vm132, 1, 0
    %v137 = vsel %vm133, 1, 0
    %v138 = vsel %vm134, 1, 0
    %v139 = vcvt.s32.f32 %v135
    %v140 = vcvt.s32.f32 %v136
    %v141 = vcvt.s32.f32 %v137
    %v142 = vcvt.s32.f32 %v138
    %143 = vmax.xlane.f32.xlu0 %v42
    %v144 = vpop.xlane.xlu0 %143
    %145 = vmax.xlane.f32.xlu0 %v43
    %v146 = vpop.xlane.xlu0 %145
    %v147 = vsub.f32 %v42, %v144
    %v148 = vsub.f32 %v43, %v146
    %v149 = vmul.f32 %v147, 1.442695
    %v150 = vpow.pop %v149
    %v151 = vmul.f32 %v148, 1.442695
    %v152 = vpow.pop %v151
    %153 = vmatprep.subr.mxu0 0.0
    %v154 = vand.u32 %v115, 4294901760
    %155 = vmatpush1.msra.mxu0 %v154
    %156 = vmatprep.subr.mxu0 0.0
    %v157 = vand.u32 %v116, 4294901760
    %158 = vmatpush1.msra.mxu0 %v157
    %159 = vmatprep.subr.mxu0 0.0
    %v160 = vand.u32 %v117, 4294901760
    %161 = vmatpush1.msra.mxu0 %v160
    %162 = vmatprep.subr.mxu0 0.0
    %v163 = vand.u32 %v118, 4294901760
    %164 = vmatpush1.msra.mxu0 %v163
    %165 = vmatprep.subr.mxu0 0.0
    %v166 = vand.u32 %v119, 4294901760
    %167 = vmatpush1.msra.mxu0 %v166
    %168 = vmatprep.subr.mxu0 0.0
    %v169 = vand.u32 %v120, 4294901760
    %170 = vmatpush1.msra.mxu0 %v169
    %171 = vmatprep.subr.mxu0 0.0
    %v172 = vand.u32 %v121, 4294901760
    %173 = vmatpush1.msra.mxu0 %v172
    %174 = vmatprep.subr.mxu0 0.0
    %v175 = vand.u32 %v122, 4294901760
    %176 = vmatpush1.msra.mxu0 %v175
    %177 = vmatprep.subr.mxu0 0.0
    %v178 = vand.u32 %v123, 4294901760
    %179 = vmatpush1.msra.mxu0 %v178
    %180 = vmatprep.subr.mxu0 0.0
    %v181 = vand.u32 %v124, 4294901760
    %182 = vmatpush1.msra.mxu0 %v181
    %183 = vmatprep.subr.mxu0 0.0
    %v184 = vand.u32 %v125, 4294901760
    %185 = vmatpush1.msra.mxu0 %v184
    %186 = vmatprep.subr.mxu0 0.0
    %v187 = vand.u32 %v126, 4294901760
    %188 = vmatpush1.msra.mxu0 %v187
    %189 = vmatprep.subr.mxu0 0.0
    %v190 = vand.u32 %v127, 4294901760
    %191 = vmatpush1.msra.mxu0 %v190
    %192 = vmatprep.subr.mxu0 0.0
    %v193 = vand.u32 %v128, 4294901760
    %194 = vmatpush1.msra.mxu0 %v193
    %195 = vmatprep.subr.mxu0 0.0
    %v196 = vand.u32 %v129, 4294901760
    %197 = vmatpush1.msra.mxu0 %v196
    %198 = vmatprep.subr.mxu0 0.0
    %v199 = vand.u32 %v130, 4294901760
    %200 = vmatpush1.msra.mxu0 %v199
    %201 = vmatprep.subr.mxu0 0.0
    %202 = vmatpush1.msra.mxu0 0.0
    %203 = vmatprep.subr.mxu0 0.0
    %204 = vmatpush1.msra.mxu0 0.0
    %205 = vmatprep.subr.mxu0 0.0
    %206 = vmatpush1.msra.mxu0 0.0
    %207 = vmatprep.subr.mxu0 0.0
    %208 = vmatpush1.msra.mxu0 0.0
    %209 = vmatprep.subr.mxu0 0.0
    %210 = vmatpush1.msra.mxu0 0.0
    %211 = vmatprep.subr.mxu0 0.0
    %212 = vmatpush1.msra.mxu0 0.0
    %213 = vmatprep.subr.mxu0 0.0
    %214 = vmatpush1.msra.mxu0 0.0
    %215 = vmatprep.subr.mxu0 0.0
    %216 = vmatpush1.msra.mxu0 0.0
    %217 = vmatprep.subr.mxu0 0.0
    %218 = vmatpush1.msra.mxu0 0.0
    %219 = vmatprep.subr.mxu0 0.0
    %220 = vmatpush1.msra.mxu0 0.0
    %221 = vmatprep.subr.mxu0 0.0
    %222 = vmatpush1.msra.mxu0 0.0
    %223 = vmatprep.subr.mxu0 0.0
    %224 = vmatpush1.msra.mxu0 0.0
    %225 = vmatprep.subr.mxu0 0.0
    %226 = vmatpush1.msra.mxu0 0.0
    %227 = vmatprep.subr.mxu0 0.0
    %228 = vmatpush1.msra.mxu0 0.0
    %229 = vmatprep.subr.mxu0 0.0
    %230 = vmatpush1.msra.mxu0 0.0
    %231 = vmatprep.subr.mxu0 0.0
    %232 = vmatpush1.msra.mxu0 0.0
    %233 = vmatprep.mubr.f32.mxu0 0.0
    %v234 = vand.u32 %v150, 4294901760
    %v235 = vsub.f32 %v150, %v234
    %v236 = vand.u32 %v235, 4294901760
    %v237 = vsub.f32 %v235, %v236
    %v238 = vand.u32 %v237, 4294901760
    %239 = vmatmul.mubr.f32.gmra.mrb[0].mxu0 %v238
    %v240 = vpop.f32.mrb[0].mxu0
    %v241 = vadd.f32 0.0, %v240
    %v242 = vpop.f32.mrb[0].mxu0
    %243 = vmatprep.mubr.f32.mxu0 0.0
    %v244 = vand.u32 %v152, 4294901760
    %v245 = vsub.f32 %v152, %v244
    %v246 = vand.u32 %v245, 4294901760
    %v247 = vsub.f32 %v245, %v246
    %v248 = vand.u32 %v247, 4294901760
    %249 = vmatmul.mubr.f32.gmra.mrb[0].mxu0 %v248
    %v250 = vpop.f32.mrb[0].mxu0
    %v251 = vadd.f32 0.0, %v250
    %v252 = vpop.f32.mrb[0].mxu0
    %253 = vdwg.mxu0
    %254 = vmatprep.subr.mxu0 0.0
    %v255 = vand.u32 %v115, 4294901760
    %v256 = vsub.f32 %v115, %v255
    %v257 = vand.u32 %v256, 4294901760
    %v258 = vsub.f32 %v256, %v257
    %v259 = vand.u32 %v258, 4294901760
    %260 = vmatpush1.msra.mxu0 %v259
    %261 = vmatprep.subr.mxu0 0.0
    %v262 = vand.u32 %v116, 4294901760
    %v263 = vsub.f32 %v116, %v262
    %v264 = vand.u32 %v263, 4294901760
    %v265 = vsub.f32 %v263, %v264
    %v266 = vand.u32 %v265, 4294901760
    %267 = vmatpush1.msra.mxu0 %v266
    %268 = vmatprep.subr.mxu0 0.0
    %v269 = vand.u32 %v117, 4294901760
    %v270 = vsub.f32 %v117, %v269
    %v271 = vand.u32 %v270, 4294901760
    %v272 = vsub.f32 %v270, %v271
    %v273 = vand.u32 %v272, 4294901760
    %274 = vmatpush1.msra.mxu0 %v273
    %275 = vmatprep.subr.mxu0 0.0
    %v276 = vand.u32 %v118, 4294901760
    %v277 = vsub.f32 %v118, %v276
    %v278 = vand.u32 %v277, 4294901760
    %v279 = vsub.f32 %v277, %v278
    %v280 = vand.u32 %v279, 4294901760
    %281 = vmatpush1.msra.mxu0 %v280
    %282 = vmatprep.subr.mxu0 0.0
    %v283 = vand.u32 %v119, 4294901760
    %v284 = vsub.f32 %v119, %v283
    %v285 = vand.u32 %v284, 4294901760
    %v286 = vsub.f32 %v284, %v285
    %v287 = vand.u32 %v286, 4294901760
    %288 = vmatpush1.msra.mxu0 %v287
    %289 = vmatprep.subr.mxu0 0.0
    %v290 = vand.u32 %v120, 4294901760
    %v291 = vsub.f32 %v120, %v290
    %v292 = vand.u32 %v291, 4294901760
    %v293 = vsub.f32 %v291, %v292
    %v294 = vand.u32 %v293, 4294901760
    %295 = vmatpush1.msra.mxu0 %v294
    %296 = vmatprep.subr.mxu0 0.0
    %v297 = vand.u32 %v121, 4294901760
    %v298 = vsub.f32 %v121, %v297
    %v299 = vand.u32 %v298, 4294901760
    %v300 = vsub.f32 %v298, %v299
    %v301 = vand.u32 %v300, 4294901760
    %302 = vmatpush1.msra.mxu0 %v301
    %303 = vmatprep.subr.mxu0 0.0
    %v304 = vand.u32 %v122, 4294901760
    %v305 = vsub.f32 %v122, %v304
    %v306 = vand.u32 %v305, 4294901760
    %v307 = vsub.f32 %v305, %v306
    %v308 = vand.u32 %v307, 4294901760
    %309 = vmatpush1.msra.mxu0 %v308
    %310 = vmatprep.subr.mxu0 0.0
    %v311 = vand.u32 %v123, 4294901760
    %v312 = vsub.f32 %v123, %v311
    %v313 = vand.u32 %v312, 4294901760
    %v314 = vsub.f32 %v312, %v313
    %v315 = vand.u32 %v314, 4294901760
    %316 = vmatpush1.msra.mxu0 %v315
    %317 = vmatprep.subr.mxu0 0.0
    %v318 = vand.u32 %v124, 4294901760
    %v319 = vsub.f32 %v124, %v318
    %v320 = vand.u32 %v319, 4294901760
    %v321 = vsub.f32 %v319, %v320
    %v322 = vand.u32 %v321, 4294901760
    %323 = vmatpush1.msra.mxu0 %v322
    %324 = vmatprep.subr.mxu0 0.0
    %v325 = vand.u32 %v125, 4294901760
    %v326 = vsub.f32 %v125, %v325
    %v327 = vand.u32 %v326, 4294901760
    %v328 = vsub.f32 %v326, %v327
    %v329 = vand.u32 %v328, 4294901760
    %330 = vmatpush1.msra.mxu0 %v329
    %331 = vmatprep.subr.mxu0 0.0
    %v332 = vand.u32 %v126, 4294901760
    %v333 = vsub.f32 %v126, %v332
    %v334 = vand.u32 %v333, 4294901760
    %v335 = vsub.f32 %v333, %v334
    %v336 = vand.u32 %v335, 4294901760
    %337 = vmatpush1.msra.mxu0 %v336
    %338 = vmatprep.subr.mxu0 0.0
    %v339 = vand.u32 %v127, 4294901760
    %v340 = vsub.f32 %v127, %v339
    %v341 = vand.u32 %v340, 4294901760
    %v342 = vsub.f32 %v340, %v341
    %v343 = vand.u32 %v342, 4294901760
    %344 = vmatpush1.msra.mxu0 %v343
    %345 = vmatprep.subr.mxu0 0.0
    %v346 = vand.u32 %v128, 4294901760
    %v347 = vsub.f32 %v128, %v346
    %v348 = vand.u32 %v347, 4294901760
    %v349 = vsub.f32 %v347, %v348
    %v350 = vand.u32 %v349, 4294901760
    %351 = vmatpush1.msra.mxu0 %v350
    %352 = vmatprep.subr.mxu0 0.0
    %v353 = vand.u32 %v129, 4294901760
    %v354 = vsub.f32 %v129, %v353
    %v355 = vand.u32 %v354, 4294901760
    %v356 = vsub.f32 %v354, %v355
    %v357 = vand.u32 %v356, 4294901760
    %358 = vmatpush1.msra.mxu0 %v357
    %359 = vmatprep.subr.mxu0 0.0
    %v360 = vand.u32 %v130, 4294901760
    %v361 = vsub.f32 %v130, %v360
    %v362 = vand.u32 %v361, 4294901760
    %v363 = vsub.f32 %v361, %v362
    %v364 = vand.u32 %v363, 4294901760
    %365 = vmatpush1.msra.mxu0 %v364
    %366 = vmatprep.subr.mxu0 0.0
    %367 = vmatpush1.msra.mxu0 0.0
    %368 = vmatprep.subr.mxu0 0.0
    %369 = vmatpush1.msra.mxu0 0.0
    %370 = vmatprep.subr.mxu0 0.0
    %371 = vmatpush1.msra.mxu0 0.0
    %372 = vmatprep.subr.mxu0 0.0
    %373 = vmatpush1.msra.mxu0 0.0
    %374 = vmatprep.subr.mxu0 0.0
    %375 = vmatpush1.msra.mxu0 0.0
    %376 = vmatprep.subr.mxu0 0.0
    %377 = vmatpush1.msra.mxu0 0.0
    %378 = vmatprep.subr.mxu0 0.0
    %379 = vmatpush1.msra.mxu0 0.0
    %380 = vmatprep.subr.mxu0 0.0
    %381 = vmatpush1.msra.mxu0 0.0
    %382 = vmatprep.subr.mxu0 0.0
    %383 = vmatpush1.msra.mxu0 0.0
    %384 = vmatprep.subr.mxu0 0.0
    %385 = vmatpush1.msra.mxu0 0.0
    %386 = vmatprep.subr.mxu0 0.0
    %387 = vmatpush1.msra.mxu0 0.0
    %388 = vmatprep.subr.mxu0 0.0
    %389 = vmatpush1.msra.mxu0 0.0
    %390 = vmatprep.subr.mxu0 0.0
    %391 = vmatpush1.msra.mxu0 0.0
    %392 = vmatprep.subr.mxu0 0.0
    %393 = vmatpush1.msra.mxu0 0.0
    %394 = vmatprep.subr.mxu0 0.0
    %395 = vmatpush1.msra.mxu0 0.0
    %396 = vmatprep.subr.mxu0 0.0
    %397 = vmatpush1.msra.mxu0 0.0
    %398 = vmatprep.mubr.f32.mxu0 0.0
    %v399 = vand.u32 %v150, 4294901760
    %400 = vmatmul.mubr.f32.gmra.mrb[0].mxu0 %v399
    %v401 = vpop.f32.mrb[0].mxu0
    %v402 = vadd.f32 %v241, %v401
    %v403 = vpop.f32.mrb[0].mxu0
    %404 = vmatprep.mubr.f32.mxu0 0.0
    %v405 = vand.u32 %v152, 4294901760
    %406 = vmatmul.mubr.f32.gmra.mrb[0].mxu0 %v405
    %v407 = vpop.f32.mrb[0].mxu0
    %v408 = vadd.f32 %v251, %v407
    %v409 = vpop.f32.mrb[0].mxu0
    %410 = vdwg.mxu0
    %411 = vmatprep.subr.mxu0 0.0
    %v412 = vand.u32 %v115, 4294901760
    %v413 = vsub.f32 %v115, %v412
    %414 = vmatpush1.msra.mxu0 %v413
    %415 = vmatprep.subr.mxu0 0.0
    %v416 = vand.u32 %v116, 4294901760
    %v417 = vsub.f32 %v116, %v416
    %418 = vmatpush1.msra.mxu0 %v417
    %419 = vmatprep.subr.mxu0 0.0
    %v420 = vand.u32 %v117, 4294901760
    %v421 = vsub.f32 %v117, %v420
    %422 = vmatpush1.msra.mxu0 %v421
    %423 = vmatprep.subr.mxu0 0.0
    %v424 = vand.u32 %v118, 4294901760
    %v425 = vsub.f32 %v118, %v424
    %426 = vmatpush1.msra.mxu0 %v425
    %427 = vmatprep.subr.mxu0 0.0
    %v428 = vand.u32 %v119, 4294901760
    %v429 = vsub.f32 %v119, %v428
    %430 = vmatpush1.msra.mxu0 %v429
    %431 = vmatprep.subr.mxu0 0.0
    %v432 = vand.u32 %v120, 4294901760
    %v433 = vsub.f32 %v120, %v432
    %434 = vmatpush1.msra.mxu0 %v433
    %435 = vmatprep.subr.mxu0 0.0
    %v436 = vand.u32 %v121, 4294901760
    %v437 = vsub.f32 %v121, %v436
    %438 = vmatpush1.msra.mxu0 %v437
    %439 = vmatprep.subr.mxu0 0.0
    %v440 = vand.u32 %v122, 4294901760
    %v441 = vsub.f32 %v122, %v440
    %442 = vmatpush1.msra.mxu0 %v441
    %443 = vmatprep.subr.mxu0 0.0
    %v444 = vand.u32 %v123, 4294901760
    %v445 = vsub.f32 %v123, %v444
    %446 = vmatpush1.msra.mxu0 %v445
    %447 = vmatprep.subr.mxu0 0.0
    %v448 = vand.u32 %v124, 4294901760
    %v449 = vsub.f32 %v124, %v448
    %450 = vmatpush1.msra.mxu0 %v449
    %451 = vmatprep.subr.mxu0 0.0
    %v452 = vand.u32 %v125, 4294901760
    %v453 = vsub.f32 %v125, %v452
    %454 = vmatpush1.msra.mxu0 %v453
    %455 = vmatprep.subr.mxu0 0.0
    %v456 = vand.u32 %v126, 4294901760
    %v457 = vsub.f32 %v126, %v456
    %458 = vmatpush1.msra.mxu0 %v457
    %459 = vmatprep.subr.mxu0 0.0
    %v460 = vand.u32 %v127, 4294901760
    %v461 = vsub.f32 %v127, %v460
    %462 = vmatpush1.msra.mxu0 %v461
    %463 = vmatprep.subr.mxu0 0.0
    %v464 = vand.u32 %v128, 4294901760
    %v465 = vsub.f32 %v128, %v464
    %466 = vmatpush1.msra.mxu0 %v465
    %467 = vmatprep.subr.mxu0 0.0
    %v468 = vand.u32 %v129, 4294901760
    %v469 = vsub.f32 %v129, %v468
    %470 = vmatpush1.msra.mxu0 %v469
    %471 = vmatprep.subr.mxu0 0.0
    %v472 = vand.u32 %v130, 4294901760
    %v473 = vsub.f32 %v130, %v472
    %474 = vmatpush1.msra.mxu0 %v473
    %475 = vmatprep.subr.mxu0 0.0
    %476 = vmatpush1.msra.mxu0 0.0
    %477 = vmatprep.subr.mxu0 0.0
    %478 = vmatpush1.msra.mxu0 0.0
    %479 = vmatprep.subr.mxu0 0.0
    %480 = vmatpush1.msra.mxu0 0.0
    %481 = vmatprep.subr.mxu0 0.0
    %482 = vmatpush1.msra.mxu0 0.0
    %483 = vmatprep.subr.mxu0 0.0
    %484 = vmatpush1.msra.mxu0 0.0
    %485 = vmatprep.subr.mxu0 0.0
    %486 = vmatpush1.msra.mxu0 0.0
    %487 = vmatprep.subr.mxu0 0.0
    %488 = vmatpush1.msra.mxu0 0.0
    %489 = vmatprep.subr.mxu0 0.0
    %490 = vmatpush1.msra.mxu0 0.0
    %491 = vmatprep.subr.mxu0 0.0
    %492 = vmatpush1.msra.mxu0 0.0
    %493 = vmatprep.subr.mxu0 0.0
    %494 = vmatpush1.msra.mxu0 0.0
    %495 = vmatprep.subr.mxu0 0.0
    %496 = vmatpush1.msra.mxu0 0.0
    %497 = vmatprep.subr.mxu0 0.0
    %498 = vmatpush1.msra.mxu0 0.0
    %499 = vmatprep.subr.mxu0 0.0
    %500 = vmatpush1.msra.mxu0 0.0
    %501 = vmatprep.subr.mxu0 0.0
    %502 = vmatpush1.msra.mxu0 0.0
    %503 = vmatprep.subr.mxu0 0.0
    %504 = vmatpush1.msra.mxu0 0.0
    %505 = vmatprep.subr.mxu0 0.0
    %506 = vmatpush1.msra.mxu0 0.0
    %507 = vmatprep.mubr.f32.mxu0 0.0
    %v508 = vand.u32 %v150, 4294901760
    %v509 = vsub.f32 %v150, %v508
    %510 = vmatmul.mubr.f32.gmra.mrb[0].mxu0 %v509
    %v511 = vpop.f32.mrb[0].mxu0
    %v512 = vadd.f32 %v402, %v511
    %v513 = vpop.f32.mrb[0].mxu0
    %514 = vmatprep.mubr.f32.mxu0 0.0
    %v515 = vand.u32 %v152, 4294901760
    %v516 = vsub.f32 %v152, %v515
    %517 = vmatmul.mubr.f32.gmra.mrb[0].mxu0 %v516
    %v518 = vpop.f32.mrb[0].mxu0
    %v519 = vadd.f32 %v408, %v518
    %v520 = vpop.f32.mrb[0].mxu0
    %521 = vdwg.mxu0
    %522 = vmatprep.subr.mxu0 0.0
    %v523 = vand.u32 %v115, 4294901760
    %524 = vmatpush1.msra.mxu0 %v523
    %525 = vmatprep.subr.mxu0 0.0
    %v526 = vand.u32 %v116, 4294901760
    %527 = vmatpush1.msra.mxu0 %v526
    %528 = vmatprep.subr.mxu0 0.0
    %v529 = vand.u32 %v117, 4294901760
    %530 = vmatpush1.msra.mxu0 %v529
    %531 = vmatprep.subr.mxu0 0.0
    %v532 = vand.u32 %v118, 4294901760
    %533 = vmatpush1.msra.mxu0 %v532
    %534 = vmatprep.subr.mxu0 0.0
    %v535 = vand.u32 %v119, 4294901760
    %536 = vmatpush1.msra.mxu0 %v535
    %537 = vmatprep.subr.mxu0 0.0
    %v538 = vand.u32 %v120, 4294901760
    %539 = vmatpush1.msra.mxu0 %v538
    %540 = vmatprep.subr.mxu0 0.0
    %v541 = vand.u32 %v121, 4294901760
    %542 = vmatpush1.msra.mxu0 %v541
    %543 = vmatprep.subr.mxu0 0.0
    %v544 = vand.u32 %v122, 4294901760
    %545 = vmatpush1.msra.mxu0 %v544
    %546 = vmatprep.subr.mxu0 0.0
    %v547 = vand.u32 %v123, 4294901760
    %548 = vmatpush1.msra.mxu0 %v547
    %549 = vmatprep.subr.mxu0 0.0
    %v550 = vand.u32 %v124, 4294901760
    %551 = vmatpush1.msra.mxu0 %v550
    %552 = vmatprep.subr.mxu0 0.0
    %v553 = vand.u32 %v125, 4294901760
    %554 = vmatpush1.msra.mxu0 %v553
    %555 = vmatprep.subr.mxu0 0.0
    %v556 = vand.u32 %v126, 4294901760
    %557 = vmatpush1.msra.mxu0 %v556
    %558 = vmatprep.subr.mxu0 0.0
    %v559 = vand.u32 %v127, 4294901760
    %560 = vmatpush1.msra.mxu0 %v559
    %561 = vmatprep.subr.mxu0 0.0
    %v562 = vand.u32 %v128, 4294901760
    %563 = vmatpush1.msra.mxu0 %v562
    %564 = vmatprep.subr.mxu0 0.0
    %v565 = vand.u32 %v129, 4294901760
    %566 = vmatpush1.msra.mxu0 %v565
    %567 = vmatprep.subr.mxu0 0.0
    %v568 = vand.u32 %v130, 4294901760
    %569 = vmatpush1.msra.mxu0 %v568
    %570 = vmatprep.subr.mxu0 0.0
    %571 = vmatpush1.msra.mxu0 0.0
    %572 = vmatprep.subr.mxu0 0.0
    %573 = vmatpush1.msra.mxu0 0.0
    %574 = vmatprep.subr.mxu0 0.0
    %575 = vmatpush1.msra.mxu0 0.0
    %576 = vmatprep.subr.mxu0 0.0
    %577 = vmatpush1.msra.mxu0 0.0
    %578 = vmatprep.subr.mxu0 0.0
    %579 = vmatpush1.msra.mxu0 0.0
    %580 = vmatprep.subr.mxu0 0.0
    %581 = vmatpush1.msra.mxu0 0.0
    %582 = vmatprep.subr.mxu0 0.0
    %583 = vmatpush1.msra.mxu0 0.0
    %584 = vmatprep.subr.mxu0 0.0
    %585 = vmatpush1.msra.mxu0 0.0
    %586 = vmatprep.subr.mxu0 0.0
    %587 = vmatpush1.msra.mxu0 0.0
    %588 = vmatprep.subr.mxu0 0.0
    %589 = vmatpush1.msra.mxu0 0.0
    %590 = vmatprep.subr.mxu0 0.0
    %591 = vmatpush1.msra.mxu0 0.0
    %592 = vmatprep.subr.mxu0 0.0
    %593 = vmatpush1.msra.mxu0 0.0
    %594 = vmatprep.subr.mxu0 0.0
    %595 = vmatpush1.msra.mxu0 0.0
    %596 = vmatprep.subr.mxu0 0.0
    %597 = vmatpush1.msra.mxu0 0.0
    %598 = vmatprep.subr.mxu0 0.0
    %599 = vmatpush1.msra.mxu0 0.0
    %600 = vmatprep.subr.mxu0 0.0
    %601 = vmatpush1.msra.mxu0 0.0
    %602 = vmatprep.mubr.f32.mxu0 0.0
    %v603 = vand.u32 %v150, 4294901760
    %v604 = vsub.f32 %v150, %v603
    %v605 = vand.u32 %v604, 4294901760
    %606 = vmatmul.mubr.f32.gmra.mrb[0].mxu0 %v605
    %v607 = vpop.f32.mrb[0].mxu0
    %v608 = vadd.f32 %v512, %v607
    %v609 = vpop.f32.mrb[0].mxu0
    %610 = vmatprep.mubr.f32.mxu0 0.0
    %v611 = vand.u32 %v152, 4294901760
    %v612 = vsub.f32 %v152, %v611
    %v613 = vand.u32 %v612, 4294901760
    %614 = vmatmul.mubr.f32.gmra.mrb[0].mxu0 %v613
    %v615 = vpop.f32.mrb[0].mxu0
    %v616 = vadd.f32 %v519, %v615
    %v617 = vpop.f32.mrb[0].mxu0
    %618 = vdwg.mxu0
    %619 = vmatprep.subr.mxu0 0.0
    %v620 = vand.u32 %v115, 4294901760
    %v621 = vsub.f32 %v115, %v620
    %v622 = vand.u32 %v621, 4294901760
    %623 = vmatpush1.msra.mxu0 %v622
    %624 = vmatprep.subr.mxu0 0.0
    %v625 = vand.u32 %v116, 4294901760
    %v626 = vsub.f32 %v116, %v625
    %v627 = vand.u32 %v626, 4294901760
    %628 = vmatpush1.msra.mxu0 %v627
    %629 = vmatprep.subr.mxu0 0.0
    %v630 = vand.u32 %v117, 4294901760
    %v631 = vsub.f32 %v117, %v630
    %v632 = vand.u32 %v631, 4294901760
    %633 = vmatpush1.msra.mxu0 %v632
    %634 = vmatprep.subr.mxu0 0.0
    %v635 = vand.u32 %v118, 4294901760
    %v636 = vsub.f32 %v118, %v635
    %v637 = vand.u32 %v636, 4294901760
    %638 = vmatpush1.msra.mxu0 %v637
    %639 = vmatprep.subr.mxu0 0.0
    %v640 = vand.u32 %v119, 4294901760
    %v641 = vsub.f32 %v119, %v640
    %v642 = vand.u32 %v641, 4294901760
    %643 = vmatpush1.msra.mxu0 %v642
    %644 = vmatprep.subr.mxu0 0.0
    %v645 = vand.u32 %v120, 4294901760
    %v646 = vsub.f32 %v120, %v645
    %v647 = vand.u32 %v646, 4294901760
    %648 = vmatpush1.msra.mxu0 %v647
    %649 = vmatprep.subr.mxu0 0.0
    %v650 = vand.u32 %v121, 4294901760
    %v651 = vsub.f32 %v121, %v650
    %v652 = vand.u32 %v651, 4294901760
    %653 = vmatpush1.msra.mxu0 %v652
    %654 = vmatprep.subr.mxu0 0.0
    %v655 = vand.u32 %v122, 4294901760
    %v656 = vsub.f32 %v122, %v655
    %v657 = vand.u32 %v656, 4294901760
    %658 = vmatpush1.msra.mxu0 %v657
    %659 = vmatprep.subr.mxu0 0.0
    %v660 = vand.u32 %v123, 4294901760
    %v661 = vsub.f32 %v123, %v660
    %v662 = vand.u32 %v661, 4294901760
    %663 = vmatpush1.msra.mxu0 %v662
    %664 = vmatprep.subr.mxu0 0.0
    %v665 = vand.u32 %v124, 4294901760
    %v666 = vsub.f32 %v124, %v665
    %v667 = vand.u32 %v666, 4294901760
    %668 = vmatpush1.msra.mxu0 %v667
    %669 = vmatprep.subr.mxu0 0.0
    %v670 = vand.u32 %v125, 4294901760
    %v671 = vsub.f32 %v125, %v670
    %v672 = vand.u32 %v671, 4294901760
    %673 = vmatpush1.msra.mxu0 %v672
    %674 = vmatprep.subr.mxu0 0.0
    %v675 = vand.u32 %v126, 4294901760
    %v676 = vsub.f32 %v126, %v675
    %v677 = vand.u32 %v676, 4294901760
    %678 = vmatpush1.msra.mxu0 %v677
    %679 = vmatprep.subr.mxu0 0.0
    %v680 = vand.u32 %v127, 4294901760
    %v681 = vsub.f32 %v127, %v680
    %v682 = vand.u32 %v681, 4294901760
    %683 = vmatpush1.msra.mxu0 %v682
    %684 = vmatprep.subr.mxu0 0.0
    %v685 = vand.u32 %v128, 4294901760
    %v686 = vsub.f32 %v128, %v685
    %v687 = vand.u32 %v686, 4294901760
    %688 = vmatpush1.msra.mxu0 %v687
    %689 = vmatprep.subr.mxu0 0.0
    %v690 = vand.u32 %v129, 4294901760
    %v691 = vsub.f32 %v129, %v690
    %v692 = vand.u32 %v691, 4294901760
    %693 = vmatpush1.msra.mxu0 %v692
    %694 = vmatprep.subr.mxu0 0.0
    %v695 = vand.u32 %v130, 4294901760
    %v696 = vsub.f32 %v130, %v695
    %v697 = vand.u32 %v696, 4294901760
    %698 = vmatpush1.msra.mxu0 %v697
    %699 = vmatprep.subr.mxu0 0.0
    %700 = vmatpush1.msra.mxu0 0.0
    %701 = vmatprep.subr.mxu0 0.0
    %702 = vmatpush1.msra.mxu0 0.0
    %703 = vmatprep.subr.mxu0 0.0
    %704 = vmatpush1.msra.mxu0 0.0
    %705 = vmatprep.subr.mxu0 0.0
    %706 = vmatpush1.msra.mxu0 0.0
    %707 = vmatprep.subr.mxu0 0.0
    %708 = vmatpush1.msra.mxu0 0.0
    %709 = vmatprep.subr.mxu0 0.0
    %710 = vmatpush1.msra.mxu0 0.0
    %711 = vmatprep.subr.mxu0 0.0
    %712 = vmatpush1.msra.mxu0 0.0
    %713 = vmatprep.subr.mxu0 0.0
    %714 = vmatpush1.msra.mxu0 0.0
    %715 = vmatprep.subr.mxu0 0.0
    %716 = vmatpush1.msra.mxu0 0.0
    %717 = vmatprep.subr.mxu0 0.0
    %718 = vmatpush1.msra.mxu0 0.0
    %719 = vmatprep.subr.mxu0 0.0
    %720 = vmatpush1.msra.mxu0 0.0
    %721 = vmatprep.subr.mxu0 0.0
    %722 = vmatpush1.msra.mxu0 0.0
    %723 = vmatprep.subr.mxu0 0.0
    %724 = vmatpush1.msra.mxu0 0.0
    %725 = vmatprep.subr.mxu0 0.0
    %726 = vmatpush1.msra.mxu0 0.0
    %727 = vmatprep.subr.mxu0 0.0
    %728 = vmatpush1.msra.mxu0 0.0
    %729 = vmatprep.subr.mxu0 0.0
    %730 = vmatpush1.msra.mxu0 0.0
    %731 = vmatprep.mubr.f32.mxu0 0.0
    %v732 = vand.u32 %v150, 4294901760
    %733 = vmatmul.mubr.f32.gmra.mrb[0].mxu0 %v732
    %v734 = vpop.f32.mrb[0].mxu0
    %v735 = vadd.f32 %v608, %v734
    %v736 = vpop.f32.mrb[0].mxu0
    %737 = vmatprep.mubr.f32.mxu0 0.0
    %v738 = vand.u32 %v152, 4294901760
    %739 = vmatmul.mubr.f32.gmra.mrb[0].mxu0 %v738
    %v740 = vpop.f32.mrb[0].mxu0
    %v741 = vadd.f32 %v616, %v740
    %v742 = vpop.f32.mrb[0].mxu0
    %743 = vdwg.mxu0
    %744 = vmatprep.subr.mxu0 0.0
    %v745 = vand.u32 %v115, 4294901760
    %746 = vmatpush1.msra.mxu0 %v745
    %747 = vmatprep.subr.mxu0 0.0
    %v748 = vand.u32 %v116, 4294901760
    %749 = vmatpush1.msra.mxu0 %v748
    %750 = vmatprep.subr.mxu0 0.0
    %v751 = vand.u32 %v117, 4294901760
    %752 = vmatpush1.msra.mxu0 %v751
    %753 = vmatprep.subr.mxu0 0.0
    %v754 = vand.u32 %v118, 4294901760
    %755 = vmatpush1.msra.mxu0 %v754
    %756 = vmatprep.subr.mxu0 0.0
    %v757 = vand.u32 %v119, 4294901760
    %758 = vmatpush1.msra.mxu0 %v757
    %759 = vmatprep.subr.mxu0 0.0
    %v760 = vand.u32 %v120, 4294901760
    %761 = vmatpush1.msra.mxu0 %v760
    %762 = vmatprep.subr.mxu0 0.0
    %v763 = vand.u32 %v121, 4294901760
    %764 = vmatpush1.msra.mxu0 %v763
    %765 = vmatprep.subr.mxu0 0.0
    %v766 = vand.u32 %v122, 4294901760
    %767 = vmatpush1.msra.mxu0 %v766
    %768 = vmatprep.subr.mxu0 0.0
    %v769 = vand.u32 %v123, 4294901760
    %770 = vmatpush1.msra.mxu0 %v769
    %771 = vmatprep.subr.mxu0 0.0
    %v772 = vand.u32 %v124, 4294901760
    %773 = vmatpush1.msra.mxu0 %v772
    %774 = vmatprep.subr.mxu0 0.0
    %v775 = vand.u32 %v125, 4294901760
    %776 = vmatpush1.msra.mxu0 %v775
    %777 = vmatprep.subr.mxu0 0.0
    %v778 = vand.u32 %v126, 4294901760
    %779 = vmatpush1.msra.mxu0 %v778
    %780 = vmatprep.subr.mxu0 0.0
    %v781 = vand.u32 %v127, 4294901760
    %782 = vmatpush1.msra.mxu0 %v781
    %783 = vmatprep.subr.mxu0 0.0
    %v784 = vand.u32 %v128, 4294901760
    %785 = vmatpush1.msra.mxu0 %v784
    %786 = vmatprep.subr.mxu0 0.0
    %v787 = vand.u32 %v129, 4294901760
    %788 = vmatpush1.msra.mxu0 %v787
    %789 = vmatprep.subr.mxu0 0.0
    %v790 = vand.u32 %v130, 4294901760
    %791 = vmatpush1.msra.mxu0 %v790
    %792 = vmatprep.subr.mxu0 0.0
    %793 = vmatpush1.msra.mxu0 0.0
    %794 = vmatprep.subr.mxu0 0.0
    %795 = vmatpush1.msra.mxu0 0.0
    %796 = vmatprep.subr.mxu0 0.0
    %797 = vmatpush1.msra.mxu0 0.0
    %798 = vmatprep.subr.mxu0 0.0
    %799 = vmatpush1.msra.mxu0 0.0
    %800 = vmatprep.subr.mxu0 0.0
    %801 = vmatpush1.msra.mxu0 0.0
    %802 = vmatprep.subr.mxu0 0.0
    %803 = vmatpush1.msra.mxu0 0.0
    %804 = vmatprep.subr.mxu0 0.0
    %805 = vmatpush1.msra.mxu0 0.0
    %806 = vmatprep.subr.mxu0 0.0
    %807 = vmatpush1.msra.mxu0 0.0
    %808 = vmatprep.subr.mxu0 0.0
    %809 = vmatpush1.msra.mxu0 0.0
    %810 = vmatprep.subr.mxu0 0.0
    %811 = vmatpush1.msra.mxu0 0.0
    %812 = vmatprep.subr.mxu0 0.0
    %813 = vmatpush1.msra.mxu0 0.0
    %814 = vmatprep.subr.mxu0 0.0
    %815 = vmatpush1.msra.mxu0 0.0
    %816 = vmatprep.subr.mxu0 0.0
    %817 = vmatpush1.msra.mxu0 0.0
    %818 = vmatprep.subr.mxu0 0.0
    %819 = vmatpush1.msra.mxu0 0.0
    %820 = vmatprep.subr.mxu0 0.0
    %821 = vmatpush1.msra.mxu0 0.0
    %822 = vmatprep.subr.mxu0 0.0
    %823 = vmatpush1.msra.mxu0 0.0
    %824 = vmatprep.mubr.f32.mxu0 0.0
    %v825 = vand.u32 %v150, 4294901760
    %826 = vmatmul.mubr.f32.gmra.mrb[0].mxu0 %v825
    %v827 = vpop.f32.mrb[0].mxu0
    %v828 = vadd.f32 %v735, %v827
    %v829 = vpop.f32.mrb[0].mxu0
    %830 = vmatprep.mubr.f32.mxu0 0.0
    %v831 = vand.u32 %v152, 4294901760
    %832 = vmatmul.mubr.f32.gmra.mrb[0].mxu0 %v831
    %v833 = vpop.f32.mrb[0].mxu0
    %v834 = vadd.f32 %v741, %v833
    %v835 = vpop.f32.mrb[0].mxu0
    %836 = vdwg.mxu0
    %vm837 = vcmask 261120
    %v839 = vsel %vm837, %v828, 0
    %v842 = vsel %vm837, %v834, 0
    %844 = vmatprep.subr.mxu0 0.0
    %v845 = vand.u32 %v139, 4294901760
    %846 = vmatpush1.msra.mxu0 %v845
    %847 = vmatprep.subr.mxu0 0.0
    %v848 = vand.u32 %v140, 4294901760
    %849 = vmatpush1.msra.mxu0 %v848
    %850 = vmatprep.subr.mxu0 0.0
    %v851 = vand.u32 %v141, 4294901760
    %852 = vmatpush1.msra.mxu0 %v851
    %853 = vmatprep.subr.mxu0 0.0
    %v854 = vand.u32 %v142, 4294901760
    %855 = vmatpush1.msra.mxu0 %v854
    %856 = vmatprep.subr.mxu0 0.0
    %857 = vmatpush1.msra.mxu0 0.0
    %858 = vmatprep.subr.mxu0 0.0
    %859 = vmatpush1.msra.mxu0 0.0
    %860 = vmatprep.subr.mxu0 0.0
    %861 = vmatpush1.msra.mxu0 0.0
    %862 = vmatprep.subr.mxu0 0.0
    %863 = vmatpush1.msra.mxu0 0.0
    %864 = vmatprep.subr.mxu0 0.0
    %865 = vmatpush1.msra.mxu0 0.0
    %866 = vmatprep.subr.mxu0 0.0
    %867 = vmatpush1.msra.mxu0 0.0
    %868 = vmatprep.subr.mxu0 0.0
    %869 = vmatpush1.msra.mxu0 0.0
    %870 = vmatprep.subr.mxu0 0.0
    %871 = vmatpush1.msra.mxu0 0.0
    %872 = vmatprep.subr.mxu0 0.0
    %873 = vmatpush1.msra.mxu0 0.0
    %874 = vmatprep.subr.mxu0 0.0
    %875 = vmatpush1.msra.mxu0 0.0
    %876 = vmatprep.subr.mxu0 0.0
    %877 = vmatpush1.msra.mxu0 0.0
    %878 = vmatprep.subr.mxu0 0.0
    %879 = vmatpush1.msra.mxu0 0.0
    %880 = vmatprep.subr.mxu0 0.0
    %881 = vmatpush1.msra.mxu0 0.0
    %882 = vmatprep.subr.mxu0 0.0
    %883 = vmatpush1.msra.mxu0 0.0
    %884 = vmatprep.subr.mxu0 0.0
    %885 = vmatpush1.msra.mxu0 0.0
    %886 = vmatprep.subr.mxu0 0.0
    %887 = vmatpush1.msra.mxu0 0.0
    %888 = vmatprep.subr.mxu0 0.0
    %889 = vmatpush1.msra.mxu0 0.0
    %890 = vmatprep.subr.mxu0 0.0
    %891 = vmatpush1.msra.mxu0 0.0
    %892 = vmatprep.subr.mxu0 0.0
    %893 = vmatpush1.msra.mxu0 0.0
    %894 = vmatprep.subr.mxu0 0.0
    %895 = vmatpush1.msra.mxu0 0.0
    %896 = vmatprep.subr.mxu0 0.0
    %897 = vmatpush1.msra.mxu0 0.0
    %898 = vmatprep.subr.mxu0 0.0
    %899 = vmatpush1.msra.mxu0 0.0
    %900 = vmatprep.subr.mxu0 0.0
    %901 = vmatpush1.msra.mxu0 0.0
    %902 = vmatprep.subr.mxu0 0.0
    %903 = vmatpush1.msra.mxu0 0.0
    %904 = vmatprep.subr.mxu0 0.0
    %905 = vmatpush1.msra.mxu0 0.0
    %906 = vmatprep.subr.mxu0 0.0
    %907 = vmatpush1.msra.mxu0 0.0
    %908 = vmatprep.subr.mxu0 0.0
    %909 = vmatpush1.msra.mxu0 0.0
    %910 = vmatprep.subr.mxu0 0.0
    %911 = vmatpush1.msra.mxu0 0.0
    %912 = vmatprep.mubr.f32.mxu0 0.0
    %v913 = vand.u32 %v839, 4294901760
    %v914 = vsub.f32 %v839, %v913
    %v915 = vand.u32 %v914, 4294901760
    %v916 = vsub.f32 %v914, %v915
    %v917 = vand.u32 %v916, 4294901760
    %918 = vmatmul.mubr.f32.gmra.mrb[0].mxu0 %v917
    %v919 = vpop.f32.mrb[0].mxu0
    %v920 = vadd.f32 0.0, %v919
    %v921 = vpop.f32.mrb[0].mxu0
    %922 = vmatprep.mubr.f32.mxu0 0.0
    %v923 = vand.u32 %v842, 4294901760
    %v924 = vsub.f32 %v842, %v923
    %v925 = vand.u32 %v924, 4294901760
    %v926 = vsub.f32 %v924, %v925
    %v927 = vand.u32 %v926, 4294901760
    %928 = vmatmul.mubr.f32.gmra.mrb[0].mxu0 %v927
    %v929 = vpop.f32.mrb[0].mxu0
    %v930 = vadd.f32 0.0, %v929
    %v931 = vpop.f32.mrb[0].mxu0
    %932 = vdwg.mxu0
    %933 = vmatprep.subr.mxu0 0.0
    %v934 = vand.u32 %v139, 4294901760
    %v935 = vsub.f32 %v139, %v934
    %v936 = vand.u32 %v935, 4294901760
    %v937 = vsub.f32 %v935, %v936
    %v938 = vand.u32 %v937, 4294901760
    %939 = vmatpush1.msra.mxu0 %v938
    %940 = vmatprep.subr.mxu0 0.0
    %v941 = vand.u32 %v140, 4294901760
    %v942 = vsub.f32 %v140, %v941
    %v943 = vand.u32 %v942, 4294901760
    %v944 = vsub.f32 %v942, %v943
    %v945 = vand.u32 %v944, 4294901760
    %946 = vmatpush1.msra.mxu0 %v945
    %947 = vmatprep.subr.mxu0 0.0
    %v948 = vand.u32 %v141, 4294901760
    %v949 = vsub.f32 %v141, %v948
    %v950 = vand.u32 %v949, 4294901760
    %v951 = vsub.f32 %v949, %v950
    %v952 = vand.u32 %v951, 4294901760
    %953 = vmatpush1.msra.mxu0 %v952
    %954 = vmatprep.subr.mxu0 0.0
    %v955 = vand.u32 %v142, 4294901760
    %v956 = vsub.f32 %v142, %v955
    %v957 = vand.u32 %v956, 4294901760
    %v958 = vsub.f32 %v956, %v957
    %v959 = vand.u32 %v958, 4294901760
    %960 = vmatpush1.msra.mxu0 %v959
    %961 = vmatprep.subr.mxu0 0.0
    %962 = vmatpush1.msra.mxu0 0.0
    %963 = vmatprep.subr.mxu0 0.0
    %964 = vmatpush1.msra.mxu0 0.0
    %965 = vmatprep.subr.mxu0 0.0
    %966 = vmatpush1.msra.mxu0 0.0
    %967 = vmatprep.subr.mxu0 0.0
    %968 = vmatpush1.msra.mxu0 0.0
    %969 = vmatprep.subr.mxu0 0.0
    %970 = vmatpush1.msra.mxu0 0.0
    %971 = vmatprep.subr.mxu0 0.0
    %972 = vmatpush1.msra.mxu0 0.0
    %973 = vmatprep.subr.mxu0 0.0
    %974 = vmatpush1.msra.mxu0 0.0
    %975 = vmatprep.subr.mxu0 0.0
    %976 = vmatpush1.msra.mxu0 0.0
    %977 = vmatprep.subr.mxu0 0.0
    %978 = vmatpush1.msra.mxu0 0.0
    %979 = vmatprep.subr.mxu0 0.0
    %980 = vmatpush1.msra.mxu0 0.0
    %981 = vmatprep.subr.mxu0 0.0
    %982 = vmatpush1.msra.mxu0 0.0
    %983 = vmatprep.subr.mxu0 0.0
    %984 = vmatpush1.msra.mxu0 0.0
    %985 = vmatprep.subr.mxu0 0.0
    %986 = vmatpush1.msra.mxu0 0.0
    %987 = vmatprep.subr.mxu0 0.0
    %988 = vmatpush1.msra.mxu0 0.0
    %989 = vmatprep.subr.mxu0 0.0
    %990 = vmatpush1.msra.mxu0 0.0
    %991 = vmatprep.subr.mxu0 0.0
    %992 = vmatpush1.msra.mxu0 0.0
    %993 = vmatprep.subr.mxu0 0.0
    %994 = vmatpush1.msra.mxu0 0.0
    %995 = vmatprep.subr.mxu0 0.0
    %996 = vmatpush1.msra.mxu0 0.0
    %997 = vmatprep.subr.mxu0 0.0
    %998 = vmatpush1.msra.mxu0 0.0
    %999 = vmatprep.subr.mxu0 0.0
    %1000 = vmatpush1.msra.mxu0 0.0
    %1001 = vmatprep.subr.mxu0 0.0
    %1002 = vmatpush1.msra.mxu0 0.0
    %1003 = vmatprep.subr.mxu0 0.0
    %1004 = vmatpush1.msra.mxu0 0.0
    %1005 = vmatprep.subr.mxu0 0.0
    %1006 = vmatpush1.msra.mxu0 0.0
    %1007 = vmatprep.subr.mxu0 0.0
    %1008 = vmatpush1.msra.mxu0 0.0
    %1009 = vmatprep.subr.mxu0 0.0
    %1010 = vmatpush1.msra.mxu0 0.0
    %1011 = vmatprep.subr.mxu0 0.0
    %1012 = vmatpush1.msra.mxu0 0.0
    %1013 = vmatprep.subr.mxu0 0.0
    %1014 = vmatpush1.msra.mxu0 0.0
    %1015 = vmatprep.subr.mxu0 0.0
    %1016 = vmatpush1.msra.mxu0 0.0
    %1017 = vmatprep.mubr.f32.mxu0 0.0
    %v1018 = vand.u32 %v839, 4294901760
    %1019 = vmatmul.mubr.f32.gmra.mrb[0].mxu0 %v1018
    %v1020 = vpop.f32.mrb[0].mxu0
    %v1021 = vadd.f32 %v920, %v1020
    %v1022 = vpop.f32.mrb[0].mxu0
    %1023 = vmatprep.mubr.f32.mxu0 0.0
    %v1024 = vand.u32 %v842, 4294901760
    %1025 = vmatmul.mubr.f32.gmra.mrb[0].mxu0 %v1024
    %v1026 = vpop.f32.mrb[0].mxu0
    %v1027 = vadd.f32 %v930, %v1026
    %v1028 = vpop.f32.mrb[0].mxu0
    %1029 = vdwg.mxu0
    %1030 = vmatprep.subr.mxu0 0.0
    %v1031 = vand.u32 %v139, 4294901760
    %v1032 = vsub.f32 %v139, %v1031
    %1033 = vmatpush1.msra.mxu0 %v1032
    %1034 = vmatprep.subr.mxu0 0.0
    %v1035 = vand.u32 %v140, 4294901760
    %v1036 = vsub.f32 %v140, %v1035
    %1037 = vmatpush1.msra.mxu0 %v1036
    %1038 = vmatprep.subr.mxu0 0.0
    %v1039 = vand.u32 %v141, 4294901760
    %v1040 = vsub.f32 %v141, %v1039
    %1041 = vmatpush1.msra.mxu0 %v1040
    %1042 = vmatprep.subr.mxu0 0.0
    %v1043 = vand.u32 %v142, 4294901760
    %v1044 = vsub.f32 %v142, %v1043
    %1045 = vmatpush1.msra.mxu0 %v1044
    %1046 = vmatprep.subr.mxu0 0.0
    %1047 = vmatpush1.msra.mxu0 0.0
    %1048 = vmatprep.subr.mxu0 0.0
    %1049 = vmatpush1.msra.mxu0 0.0
    %1050 = vmatprep.subr.mxu0 0.0
    %1051 = vmatpush1.msra.mxu0 0.0
    %1052 = vmatprep.subr.mxu0 0.0
    %1053 = vmatpush1.msra.mxu0 0.0
    %1054 = vmatprep.subr.mxu0 0.0
    %1055 = vmatpush1.msra.mxu0 0.0
    %1056 = vmatprep.subr.mxu0 0.0
    %1057 = vmatpush1.msra.mxu0 0.0
    %1058 = vmatprep.subr.mxu0 0.0
    %1059 = vmatpush1.msra.mxu0 0.0
    %1060 = vmatprep.subr.mxu0 0.0
    %1061 = vmatpush1.msra.mxu0 0.0
    %1062 = vmatprep.subr.mxu0 0.0
    %1063 = vmatpush1.msra.mxu0 0.0
    %1064 = vmatprep.subr.mxu0 0.0
    %1065 = vmatpush1.msra.mxu0 0.0
    %1066 = vmatprep.subr.mxu0 0.0
    %1067 = vmatpush1.msra.mxu0 0.0
    %1068 = vmatprep.subr.mxu0 0.0
    %1069 = vmatpush1.msra.mxu0 0.0
    %1070 = vmatprep.subr.mxu0 0.0
    %1071 = vmatpush1.msra.mxu0 0.0
    %1072 = vmatprep.subr.mxu0 0.0
    %1073 = vmatpush1.msra.mxu0 0.0
    %1074 = vmatprep.subr.mxu0 0.0
    %1075 = vmatpush1.msra.mxu0 0.0
    %1076 = vmatprep.subr.mxu0 0.0
    %1077 = vmatpush1.msra.mxu0 0.0
    %1078 = vmatprep.subr.mxu0 0.0
    %1079 = vmatpush1.msra.mxu0 0.0
    %1080 = vmatprep.subr.mxu0 0.0
    %1081 = vmatpush1.msra.mxu0 0.0
    %1082 = vmatprep.subr.mxu0 0.0
    %1083 = vmatpush1.msra.mxu0 0.0
    %1084 = vmatprep.subr.mxu0 0.0
    %1085 = vmatpush1.msra.mxu0 0.0
    %1086 = vmatprep.subr.mxu0 0.0
    %1087 = vmatpush1.msra.mxu0 0.0
    %1088 = vmatprep.subr.mxu0 0.0
    %1089 = vmatpush1.msra.mxu0 0.0
    %1090 = vmatprep.subr.mxu0 0.0
    %1091 = vmatpush1.msra.mxu0 0.0
    %1092 = vmatprep.subr.mxu0 0.0
    %1093 = vmatpush1.msra.mxu0 0.0
    %1094 = vmatprep.subr.mxu0 0.0
    %1095 = vmatpush1.msra.mxu0 0.0
    %1096 = vmatprep.subr.mxu0 0.0
    %1097 = vmatpush1.msra.mxu0 0.0
    %1098 = vmatprep.subr.mxu0 0.0
    %1099 = vmatpush1.msra.mxu0 0.0
    %1100 = vmatprep.subr.mxu0 0.0
    %1101 = vmatpush1.msra.mxu0 0.0
    %1102 = vmatprep.mubr.f32.mxu0 0.0
    %v1103 = vand.u32 %v839, 4294901760
    %v1104 = vsub.f32 %v839, %v1103
    %1105 = vmatmul.mubr.f32.gmra.mrb[0].mxu0 %v1104
    %v1106 = vpop.f32.mrb[0].mxu0
    %v1107 = vadd.f32 %v1021, %v1106
    %v1108 = vpop.f32.mrb[0].mxu0
    %1109 = vmatprep.mubr.f32.mxu0 0.0
    %v1110 = vand.u32 %v842, 4294901760
    %v1111 = vsub.f32 %v842, %v1110
    %1112 = vmatmul.mubr.f32.gmra.mrb[0].mxu0 %v1111
    %v1113 = vpop.f32.mrb[0].mxu0
    %v1114 = vadd.f32 %v1027, %v1113
    %v1115 = vpop.f32.mrb[0].mxu0
    %1116 = vdwg.mxu0
    %1117 = vmatprep.subr.mxu0 0.0
    %v1118 = vand.u32 %v139, 4294901760
    %1119 = vmatpush1.msra.mxu0 %v1118
    %1120 = vmatprep.subr.mxu0 0.0
    %v1121 = vand.u32 %v140, 4294901760
    %1122 = vmatpush1.msra.mxu0 %v1121
    %1123 = vmatprep.subr.mxu0 0.0
    %v1124 = vand.u32 %v141, 4294901760
    %1125 = vmatpush1.msra.mxu0 %v1124
    %1126 = vmatprep.subr.mxu0 0.0
    %v1127 = vand.u32 %v142, 4294901760
    %1128 = vmatpush1.msra.mxu0 %v1127
    %1129 = vmatprep.subr.mxu0 0.0
    %1130 = vmatpush1.msra.mxu0 0.0
    %1131 = vmatprep.subr.mxu0 0.0
    %1132 = vmatpush1.msra.mxu0 0.0
    %1133 = vmatprep.subr.mxu0 0.0
    %1134 = vmatpush1.msra.mxu0 0.0
    %1135 = vmatprep.subr.mxu0 0.0
    %1136 = vmatpush1.msra.mxu0 0.0
    %1137 = vmatprep.subr.mxu0 0.0
    %1138 = vmatpush1.msra.mxu0 0.0
    %1139 = vmatprep.subr.mxu0 0.0
    %1140 = vmatpush1.msra.mxu0 0.0
    %1141 = vmatprep.subr.mxu0 0.0
    %1142 = vmatpush1.msra.mxu0 0.0
    %1143 = vmatprep.subr.mxu0 0.0
    %1144 = vmatpush1.msra.mxu0 0.0
    %1145 = vmatprep.subr.mxu0 0.0
    %1146 = vmatpush1.msra.mxu0 0.0
    %1147 = vmatprep.subr.mxu0 0.0
    %1148 = vmatpush1.msra.mxu0 0.0
    %1149 = vmatprep.subr.mxu0 0.0
    %1150 = vmatpush1.msra.mxu0 0.0
    %1151 = vmatprep.subr.mxu0 0.0
    %1152 = vmatpush1.msra.mxu0 0.0
    %1153 = vmatprep.subr.mxu0 0.0
    %1154 = vmatpush1.msra.mxu0 0.0
    %1155 = vmatprep.subr.mxu0 0.0
    %1156 = vmatpush1.msra.mxu0 0.0
    %1157 = vmatprep.subr.mxu0 0.0
    %1158 = vmatpush1.msra.mxu0 0.0
    %1159 = vmatprep.subr.mxu0 0.0
    %1160 = vmatpush1.msra.mxu0 0.0
    %1161 = vmatprep.subr.mxu0 0.0
    %1162 = vmatpush1.msra.mxu0 0.0
    %1163 = vmatprep.subr.mxu0 0.0
    %1164 = vmatpush1.msra.mxu0 0.0
    %1165 = vmatprep.subr.mxu0 0.0
    %1166 = vmatpush1.msra.mxu0 0.0
    %1167 = vmatprep.subr.mxu0 0.0
    %1168 = vmatpush1.msra.mxu0 0.0
    %1169 = vmatprep.subr.mxu0 0.0
    %1170 = vmatpush1.msra.mxu0 0.0
    %1171 = vmatprep.subr.mxu0 0.0
    %1172 = vmatpush1.msra.mxu0 0.0
    %1173 = vmatprep.subr.mxu0 0.0
    %1174 = vmatpush1.msra.mxu0 0.0
    %1175 = vmatprep.subr.mxu0 0.0
    %1176 = vmatpush1.msra.mxu0 0.0
    %1177 = vmatprep.subr.mxu0 0.0
    %1178 = vmatpush1.msra.mxu0 0.0
    %1179 = vmatprep.subr.mxu0 0.0
    %1180 = vmatpush1.msra.mxu0 0.0
    %1181 = vmatprep.subr.mxu0 0.0
    %1182 = vmatpush1.msra.mxu0 0.0
    %1183 = vmatprep.subr.mxu0 0.0
    %1184 = vmatpush1.msra.mxu0 0.0
    %1185 = vmatprep.mubr.f32.mxu0 0.0
    %v1186 = vand.u32 %v839, 4294901760
    %v1187 = vsub.f32 %v839, %v1186
    %v1188 = vand.u32 %v1187, 4294901760
    %1189 = vmatmul.mubr.f32.gmra.mrb[0].mxu0 %v1188
    %v1190 = vpop.f32.mrb[0].mxu0
    %v1191 = vadd.f32 %v1107, %v1190
    %v1192 = vpop.f32.mrb[0].mxu0
    %1193 = vmatprep.mubr.f32.mxu0 0.0
    %v1194 = vand.u32 %v842, 4294901760
    %v1195 = vsub.f32 %v842, %v1194
    %v1196 = vand.u32 %v1195, 4294901760
    %1197 = vmatmul.mubr.f32.gmra.mrb[0].mxu0 %v1196
    %v1198 = vpop.f32.mrb[0].mxu0
    %v1199 = vadd.f32 %v1114, %v1198
    %v1200 = vpop.f32.mrb[0].mxu0
    %1201 = vdwg.mxu0
    %1202 = vmatprep.subr.mxu0 0.0
    %v1203 = vand.u32 %v139, 4294901760
    %v1204 = vsub.f32 %v139, %v1203
    %v1205 = vand.u32 %v1204, 4294901760
    %1206 = vmatpush1.msra.mxu0 %v1205
    %1207 = vmatprep.subr.mxu0 0.0
    %v1208 = vand.u32 %v140, 4294901760
    %v1209 = vsub.f32 %v140, %v1208
    %v1210 = vand.u32 %v1209, 4294901760
    %1211 = vmatpush1.msra.mxu0 %v1210
    %1212 = vmatprep.subr.mxu0 0.0
    %v1213 = vand.u32 %v141, 4294901760
    %v1214 = vsub.f32 %v141, %v1213
    %v1215 = vand.u32 %v1214, 4294901760
    %1216 = vmatpush1.msra.mxu0 %v1215
    %1217 = vmatprep.subr.mxu0 0.0
    %v1218 = vand.u32 %v142, 4294901760
    %v1219 = vsub.f32 %v142, %v1218
    %v1220 = vand.u32 %v1219, 4294901760
    %1221 = vmatpush1.msra.mxu0 %v1220
    %1222 = vmatprep.subr.mxu0 0.0
    %1223 = vmatpush1.msra.mxu0 0.0
    %1224 = vmatprep.subr.mxu0 0.0
    %1225 = vmatpush1.msra.mxu0 0.0
    %1226 = vmatprep.subr.mxu0 0.0
    %1227 = vmatpush1.msra.mxu0 0.0
    %1228 = vmatprep.subr.mxu0 0.0
    %1229 = vmatpush1.msra.mxu0 0.0
    %1230 = vmatprep.subr.mxu0 0.0
    %1231 = vmatpush1.msra.mxu0 0.0
    %1232 = vmatprep.subr.mxu0 0.0
    %1233 = vmatpush1.msra.mxu0 0.0
    %1234 = vmatprep.subr.mxu0 0.0
    %1235 = vmatpush1.msra.mxu0 0.0
    %1236 = vmatprep.subr.mxu0 0.0
    %1237 = vmatpush1.msra.mxu0 0.0
    %1238 = vmatprep.subr.mxu0 0.0
    %1239 = vmatpush1.msra.mxu0 0.0
    %1240 = vmatprep.subr.mxu0 0.0
    %1241 = vmatpush1.msra.mxu0 0.0
    %1242 = vmatprep.subr.mxu0 0.0
    %1243 = vmatpush1.msra.mxu0 0.0
    %1244 = vmatprep.subr.mxu0 0.0
    %1245 = vmatpush1.msra.mxu0 0.0
    %1246 = vmatprep.subr.mxu0 0.0
    %1247 = vmatpush1.msra.mxu0 0.0
    %1248 = vmatprep.subr.mxu0 0.0
    %1249 = vmatpush1.msra.mxu0 0.0
    %1250 = vmatprep.subr.mxu0 0.0
    %1251 = vmatpush1.msra.mxu0 0.0
    %1252 = vmatprep.subr.mxu0 0.0
    %1253 = vmatpush1.msra.mxu0 0.0
    %1254 = vmatprep.subr.mxu0 0.0
    %1255 = vmatpush1.msra.mxu0 0.0
    %1256 = vmatprep.subr.mxu0 0.0
    %1257 = vmatpush1.msra.mxu0 0.0
    %1258 = vmatprep.subr.mxu0 0.0
    %1259 = vmatpush1.msra.mxu0 0.0
    %1260 = vmatprep.subr.mxu0 0.0
    %1261 = vmatpush1.msra.mxu0 0.0
    %1262 = vmatprep.subr.mxu0 0.0
    %1263 = vmatpush1.msra.mxu0 0.0
    %1264 = vmatprep.subr.mxu0 0.0
    %1265 = vmatpush1.msra.mxu0 0.0
    %1266 = vmatprep.subr.mxu0 0.0
    %1267 = vmatpush1.msra.mxu0 0.0
    %1268 = vmatprep.subr.mxu0 0.0
    %1269 = vmatpush1.msra.mxu0 0.0
    %1270 = vmatprep.subr.mxu0 0.0
    %1271 = vmatpush1.msra.mxu0 0.0
    %1272 = vmatprep.subr.mxu0 0.0
    %1273 = vmatpush1.msra.mxu0 0.0
    %1274 = vmatprep.subr.mxu0 0.0
    %1275 = vmatpush1.msra.mxu0 0.0
    %1276 = vmatprep.subr.mxu0 0.0
    %1277 = vmatpush1.msra.mxu0 0.0
    %1278 = vmatprep.mubr.f32.mxu0 0.0
    %v1279 = vand.u32 %v839, 4294901760
    %1280 = vmatmul.mubr.f32.gmra.mrb[0].mxu0 %v1279
    %v1281 = vpop.f32.mrb[0].mxu0
    %v1282 = vadd.f32 %v1191, %v1281
    %v1283 = vpop.f32.mrb[0].mxu0
    %1284 = vmatprep.mubr.f32.mxu0 0.0
    %v1285 = vand.u32 %v842, 4294901760
    %1286 = vmatmul.mubr.f32.gmra.mrb[0].mxu0 %v1285
    %v1287 = vpop.f32.mrb[0].mxu0
    %v1288 = vadd.f32 %v1199, %v1287
    %v1289 = vpop.f32.mrb[0].mxu0
    %1290 = vdwg.mxu0
    %1291 = vmatprep.subr.mxu0 0.0
    %v1292 = vand.u32 %v139, 4294901760
    %1293 = vmatpush1.msra.mxu0 %v1292
    %1294 = vmatprep.subr.mxu0 0.0
    %v1295 = vand.u32 %v140, 4294901760
    %1296 = vmatpush1.msra.mxu0 %v1295
    %1297 = vmatprep.subr.mxu0 0.0
    %v1298 = vand.u32 %v141, 4294901760
    %1299 = vmatpush1.msra.mxu0 %v1298
    %1300 = vmatprep.subr.mxu0 0.0
    %v1301 = vand.u32 %v142, 4294901760
    %1302 = vmatpush1.msra.mxu0 %v1301
    %1303 = vmatprep.subr.mxu0 0.0
    %1304 = vmatpush1.msra.mxu0 0.0
    %1305 = vmatprep.subr.mxu0 0.0
    %1306 = vmatpush1.msra.mxu0 0.0
    %1307 = vmatprep.subr.mxu0 0.0
    %1308 = vmatpush1.msra.mxu0 0.0
    %1309 = vmatprep.subr.mxu0 0.0
    %1310 = vmatpush1.msra.mxu0 0.0
    %1311 = vmatprep.subr.mxu0 0.0
    %1312 = vmatpush1.msra.mxu0 0.0
    %1313 = vmatprep.subr.mxu0 0.0
    %1314 = vmatpush1.msra.mxu0 0.0
    %1315 = vmatprep.subr.mxu0 0.0
    %1316 = vmatpush1.msra.mxu0 0.0
    %1317 = vmatprep.subr.mxu0 0.0
    %1318 = vmatpush1.msra.mxu0 0.0
    %1319 = vmatprep.subr.mxu0 0.0
    %1320 = vmatpush1.msra.mxu0 0.0
    %1321 = vmatprep.subr.mxu0 0.0
    %1322 = vmatpush1.msra.mxu0 0.0
    %1323 = vmatprep.subr.mxu0 0.0
    %1324 = vmatpush1.msra.mxu0 0.0
    %1325 = vmatprep.subr.mxu0 0.0
    %1326 = vmatpush1.msra.mxu0 0.0
    %1327 = vmatprep.subr.mxu0 0.0
    %1328 = vmatpush1.msra.mxu0 0.0
    %1329 = vmatprep.subr.mxu0 0.0
    %1330 = vmatpush1.msra.mxu0 0.0
    %1331 = vmatprep.subr.mxu0 0.0
    %1332 = vmatpush1.msra.mxu0 0.0
    %1333 = vmatprep.subr.mxu0 0.0
    %1334 = vmatpush1.msra.mxu0 0.0
    %1335 = vmatprep.subr.mxu0 0.0
    %1336 = vmatpush1.msra.mxu0 0.0
    %1337 = vmatprep.subr.mxu0 0.0
    %1338 = vmatpush1.msra.mxu0 0.0
    %1339 = vmatprep.subr.mxu0 0.0
    %1340 = vmatpush1.msra.mxu0 0.0
    %1341 = vmatprep.subr.mxu0 0.0
    %1342 = vmatpush1.msra.mxu0 0.0
    %1343 = vmatprep.subr.mxu0 0.0
    %1344 = vmatpush1.msra.mxu0 0.0
    %1345 = vmatprep.subr.mxu0 0.0
    %1346 = vmatpush1.msra.mxu0 0.0
    %1347 = vmatprep.subr.mxu0 0.0
    %1348 = vmatpush1.msra.mxu0 0.0
    %1349 = vmatprep.subr.mxu0 0.0
    %1350 = vmatpush1.msra.mxu0 0.0
    %1351 = vmatprep.subr.mxu0 0.0
    %1352 = vmatpush1.msra.mxu0 0.0
    %1353 = vmatprep.subr.mxu0 0.0
    %1354 = vmatpush1.msra.mxu0 0.0
    %1355 = vmatprep.subr.mxu0 0.0
    %1356 = vmatpush1.msra.mxu0 0.0
    %1357 = vmatprep.subr.mxu0 0.0
    %1358 = vmatpush1.msra.mxu0 0.0
    %1359 = vmatprep.mubr.f32.mxu0 0.0
    %v1360 = vand.u32 %v839, 4294901760
    %1361 = vmatmul.mubr.f32.gmra.mrb[0].mxu0 %v1360
    %v1362 = vpop.f32.mrb[0].mxu0
    %v1363 = vadd.f32 %v1282, %v1362
    %v1364 = vpop.f32.mrb[0].mxu0
    %1365 = vmatprep.mubr.f32.mxu0 0.0
    %v1366 = vand.u32 %v842, 4294901760
    %1367 = vmatmul.mubr.f32.gmra.mrb[0].mxu0 %v1366
    %v1368 = vpop.f32.mrb[0].mxu0
    %v1369 = vadd.f32 %v1288, %v1368
    %v1370 = vpop.f32.mrb[0].mxu0
    %1371 = vdwg.mxu0
    %v1372 = vrcp.pop %v1363
    %v1373 = vmul.f32 %v150, %v1372
    %v1374 = vrcp.pop %v1369
    %v1375 = vmul.f32 %v152, %v1374
    %v1376 = vcvt.s32.f32 %v44
    %v1377 = vcvt.s32.f32 %v45
    %v1379 = vsel %vm837, %v1376, 0
    %v1382 = vsel %vm837, %v1377, 0
    %1384 = vmatprep.subr.mxu0 0.0
    %1385 = vmatpush1.msra.mxu0 %v139
    %1386 = vmatprep.subr.mxu0 0.0
    %1387 = vmatpush1.msra.mxu0 %v140
    %1388 = vmatprep.subr.mxu0 0.0
    %1389 = vmatpush1.msra.mxu0 %v141
    %1390 = vmatprep.subr.mxu0 0.0
    %1391 = vmatpush1.msra.mxu0 %v142
    %1392 = vmatprep.subr.mxu0 0.0
    %1393 = vmatpush1.msra.mxu0 0.0
    %1394 = vmatprep.subr.mxu0 0.0
    %1395 = vmatpush1.msra.mxu0 0.0
    %1396 = vmatprep.subr.mxu0 0.0
    %1397 = vmatpush1.msra.mxu0 0.0
    %1398 = vmatprep.subr.mxu0 0.0
    %1399 = vmatpush1.msra.mxu0 0.0
    %1400 = vmatprep.subr.mxu0 0.0
    %1401 = vmatpush1.msra.mxu0 0.0
    %1402 = vmatprep.subr.mxu0 0.0
    %1403 = vmatpush1.msra.mxu0 0.0
    %1404 = vmatprep.subr.mxu0 0.0
    %1405 = vmatpush1.msra.mxu0 0.0
    %1406 = vmatprep.subr.mxu0 0.0
    %1407 = vmatpush1.msra.mxu0 0.0
    %1408 = vmatprep.subr.mxu0 0.0
    %1409 = vmatpush1.msra.mxu0 0.0
    %1410 = vmatprep.subr.mxu0 0.0
    %1411 = vmatpush1.msra.mxu0 0.0
    %1412 = vmatprep.subr.mxu0 0.0
    %1413 = vmatpush1.msra.mxu0 0.0
    %1414 = vmatprep.subr.mxu0 0.0
    %1415 = vmatpush1.msra.mxu0 0.0
    %1416 = vmatprep.subr.mxu0 0.0
    %1417 = vmatpush1.msra.mxu0 0.0
    %1418 = vmatprep.subr.mxu0 0.0
    %1419 = vmatpush1.msra.mxu0 0.0
    %1420 = vmatprep.subr.mxu0 0.0
    %1421 = vmatpush1.msra.mxu0 0.0
    %1422 = vmatprep.subr.mxu0 0.0
    %1423 = vmatpush1.msra.mxu0 0.0
    %1424 = vmatprep.subr.mxu0 0.0
    %1425 = vmatpush1.msra.mxu0 0.0
    %1426 = vmatprep.subr.mxu0 0.0
    %1427 = vmatpush1.msra.mxu0 0.0
    %1428 = vmatprep.subr.mxu0 0.0
    %1429 = vmatpush1.msra.mxu0 0.0
    %1430 = vmatprep.subr.mxu0 0.0
    %1431 = vmatpush1.msra.mxu0 0.0
    %1432 = vmatprep.subr.mxu0 0.0
    %1433 = vmatpush1.msra.mxu0 0.0
    %1434 = vmatprep.subr.mxu0 0.0
    %1435 = vmatpush1.msra.mxu0 0.0
    %1436 = vmatprep.subr.mxu0 0.0
    %1437 = vmatpush1.msra.mxu0 0.0
    %1438 = vmatprep.subr.mxu0 0.0
    %1439 = vmatpush1.msra.mxu0 0.0
    %1440 = vmatprep.subr.mxu0 0.0
    %1441 = vmatpush1.msra.mxu0 0.0
    %1442 = vmatprep.subr.mxu0 0.0
    %1443 = vmatpush1.msra.mxu0 0.0
    %1444 = vmatprep.subr.mxu0 0.0
    %1445 = vmatpush1.msra.mxu0 0.0
    %1446 = vmatprep.subr.mxu0 0.0
    %1447 = vmatpush1.msra.mxu0 0.0
    %1448 = vmatprep.mubr.f32.mxu0 0.0
    %1449 = vmatmul.mubr.f32.gmra.mrb[0].mxu0 %v1379
    %v1450 = vpop.f32.mrb[0].mxu0
    %v1451 = vadd.f32 0.0, %v1450
    %v1452 = vpop.f32.mrb[0].mxu0
    %1453 = vmatprep.mubr.f32.mxu0 0.0
    %1454 = vmatmul.mubr.f32.gmra.mrb[0].mxu0 %v1382
    %v1455 = vpop.f32.mrb[0].mxu0
    %v1456 = vadd.f32 0.0, %v1455
    %v1457 = vpop.f32.mrb[0].mxu0
    %1458 = vdwg.mxu0
    %v1459 = vcvt.s32.f32 %v48
    %v1460 = vsub.f32 %v1451, %v1459
    %v1461 = vsub.f32 %v1456, %v1459
    %v1462 = vand.u32 2147483647, %v1460
    %v1463 = vand.u32 2147483647, %v1461
    %vm1464 = vcmp.lt.f32.partialorder %v1462, 0.5
    %vm1465 = vcmp.lt.f32.partialorder %v1463, 0.5
    %vm1466 = vcmp.gt.f32.partialorder %v1373, 0.5
    %vm1467 = vcmp.gt.f32.partialorder %v1375, 0.5
    %v1468 = vsub.f32 %v1373, 1e-07
    %v1469 = vsub.f32 %v1375, 1e-07
    %v1470 = vadd.f32 %v1373, 1e-07
    %v1471 = vadd.f32 %v1375, 1e-07
    %v1472 = vsel %vm1466, %v1468, %v1470
    %v1473 = vsel %vm1467, %v1469, %v1471
    %s1474 = smul.u32 0, 16
    %v1475 = vstv %s1474
    %v1476 = vadd.s32 %v1475, %v51
    %v1477 = vadd.s32 %v1475, %v52
    %v1478 = vmul.u32 %v1476, 32
    %v1479 = vmul.u32 %v1477, 32
    %v1480 = vadd.s32 %v1478, %v49
    %v1481 = vadd.s32 %v1479, %v49
    %s1482 = sld [smem:[#allocation3]]
    %v1483 = vstv %s1482
    %vm1484 = vcmp.lt.s32.totalorder %v1480, %v1483
    %vm1485 = vcmp.lt.s32.totalorder %v1481, %v1483
    %vm1486 = vmand %vm1464, %vm1484
    %vm1487 = vmand %vm1465, %vm1485
    %v1488 = vsel %vm1486, %v1472, 1.0
    %v1489 = vsel %vm1487, %v1473, 1.0
    %v1490 = vsub.f32 1.0, %v1488
    %v1491 = vsub.f32 1.0, %v1489
    %v1492 = vmul.f32 %v1490, %v1490
    %v1493 = vmul.f32 %v1491, %v1491
    %v1494 = vlog2.pop %v1488
    %v1495 = vmul.f32 %v1494, 0.6931472
    %v1496 = vlog2.pop %v1489
    %v1497 = vmul.f32 %v1496, 0.6931472
    %v1498 = vmul.f32 %v1492, %v1495
    %v1499 = vmul.f32 %v1493, %v1497
    %v1500 = vadd.f32 %v1498, %v1499
    %1501 = vadd.xlane.f32.xlu0 %v1500
    %v1502 = vpop.xlane.xlu0 %1501
    %v1503 = vrot.slane %v1502, 4
    %v1504 = vadd.f32 %v1502, %v1503
    %v1505 = vrot.slane %v1504, 2
    %v1506 = vadd.f32 %v1504, %v1505
    %v1507 = vrot.slane %v1506, 1
    %v1508 = vadd.f32 %v1506, %v1507
    %s1509 = vtos %v1508
    %v1510 = vstv %s1509
    %1511 = vst [vmem:[#allocation9] sm:$0x1] %v1510
    // Predicated region
    $region18: #{tpu_custom_call.1} parent=1 // pred_check
      _
    $region19: #{tpu_custom_call.1} parent=1 // pred_check_branch
      %1513 = sbr.rel (0) target = $region21
    $region20: #{tpu_custom_call.1} parent=1 // pred_region
      %s1515 = ssub.s32 16, 16
      %1516 = vsyncadd [#allocation6], %s1515
      %s1518 = sshll.u32 [#allocation9], 4
      %s1519 = int_to_ptr.vmem [resolvable:$true] %s1518
      %1521 = dma.vmem_to_hbm [thread:$0]  %s1519, 16, %s3, [#allocation6]
    $region21: #{tpu_custom_call.1} parent=1 // pred_fallthru
      _
    // Predicated region
    $region22: #{tpu_custom_call.1} parent=1 // pred_check
      _
    $region23: #{tpu_custom_call.1} parent=1 // pred_check_branch
      %1523 = sbr.rel (0) target = $region25
    $region24: #{tpu_custom_call.1} parent=1 // pred_region
      %1524 = dma.done [#allocation6], 16
    $region25: #{tpu_custom_call.1} parent=1 // pred_fallthru
      _
    %1525 = vsyncpa [#allocation5], 1
    %1526 = vsyncpa [#allocation8], 1
    %1527 = vsyncpa [#allocation6], 1

</llo_original>
